<compile_context>
chip_gen: v7x
topology: tpu7x:2x2x1
jax: 0.10.0
libtpu: 0.0.40
codegen_flags: <defaults>
</compile_context>

<pallas_src>
import functools
import math

import jax
import jax.numpy as jnp
from jax import lax
from jax.experimental import pallas as pl
from jax.experimental.pallas import tpu as pltpu


# ---------------------------------------------------------------------------
# 1x1 convolution: y[n, :, p] = W @ x[n, :, p] (+ b) — lane-dense over spatial.
# ---------------------------------------------------------------------------
def _conv1x1_kernel(*refs, has_bias, act):
    if has_bias:
        x_ref, w_ref, b_ref, o_ref = refs
    else:
        x_ref, w_ref, o_ref = refs
        b_ref = None
    # x_ref: (C_in, TP)   w_ref: (C_out, C_in)   o_ref: (C_out, TP)  [lane-dense output]
    acc = jnp.dot(w_ref[...], x_ref[...], preferred_element_type=jnp.float32)
    if has_bias:
        acc = acc + b_ref[...]
    if act == "relu":
        acc = jnp.maximum(acc, 0.0)
    elif act == "sigmoid":
        acc = jax.nn.sigmoid(acc)
    o_ref[...] = acc.astype(o_ref.dtype)


def conv1x1_pallas(x, weight, bias=None, act=None, tp_max=2048):
    """x: (N, C_in, H, W); weight: (C_out, C_in[,1,1]); bias: (C_out,) or None."""
    N, C_in, H, W = x.shape
    w = weight.reshape(weight.shape[0], C_in)
    C_out = w.shape[0]
    P = H * W

    # channels-first, spatial flattened onto the lane axis (contiguous reshape, no transpose)
    xf = x.reshape(N, C_in, P)
    P_pad = ((P + 127) // 128) * 128
    if P_pad != P:
        xf = jnp.pad(xf, ((0, 0), (0, 0), (0, P_pad - P)))

    tp = 128
    for cand in (2048, 1024, 512, 256, 128):
        if cand <= min(tp_max, P_pad) and P_pad % cand == 0:
            tp = cand
            break

    has_bias = bias is not None
    in_specs = [
        pl.BlockSpec((None, C_in, tp), lambda n, p: (n, 0, p)),
        pl.BlockSpec((C_out, C_in), lambda n, p: (0, 0)),
    ]
    args = [xf, w]
    if has_bias:
        in_specs.append(pl.BlockSpec((C_out, 1), lambda n, p: (0, 0)))
        args.append(bias.reshape(C_out, 1))

    yf = pl.pallas_call(
        functools.partial(_conv1x1_kernel, has_bias=has_bias, act=act),
        out_shape=jax.ShapeDtypeStruct((N, C_out, P_pad), x.dtype),
        grid_spec=pltpu.PrefetchScalarGridSpec(
            num_scalar_prefetch=0,
            grid=(N, P_pad // tp),
            in_specs=in_specs,
            out_specs=pl.BlockSpec((None, C_out, tp), lambda n, p: (n, 0, p)),
        ),
        compiler_params=pltpu.CompilerParams(
            dimension_semantics=("parallel", "parallel")
        ),
    )(*args)

    return yf[:, :, :P].reshape(N, C_out, H, W)


# ---------------------------------------------------------------------------
# 3x3 convolution (stride 1, pad 1) as 9 tap matmuls over a flattened padded slab.
# ---------------------------------------------------------------------------
def _conv3x3_kernel(x_ref, w_ref, b_ref, o_ref, *, act, length, wp):
    # x_ref: (C_in, Hp*Wp) flattened zero-padded input; w_ref: (9, C_out, C_in);
    # b_ref: (C_out, 1); o_ref: (C_out, H*Wp)  (junk columns j >= W are sliced off outside)
    xf = x_ref[...]
    acc = jnp.zeros(o_ref.shape, jnp.float32)
    for dy in range(3):
        for dx in range(3):
            off = dy * wp + dx
            acc = acc + jnp.dot(w_ref[dy * 3 + dx], xf[:, off:off + length],
                                preferred_element_type=jnp.float32)
    acc = acc + b_ref[...]
    if act == "relu":
        acc = jnp.maximum(acc, 0.0)
    o_ref[...] = acc.astype(o_ref.dtype)


def conv3x3_pallas(x, weight, bias, act=None):
    """3x3 conv, stride 1, padding 1.  x: (N, C_in, H, W); weight: (C_out, C_in, 3, 3)."""
    N, C_in, H, W = x.shape
    C_out = weight.shape[0]
    Wp = W + 2
    # 1-pixel zero halo (plus one extra bottom row so every tap's flat slice stays in range)
    x_pad = jnp.pad(x, ((0, 0), (0, 0), (1, 2), (1, 1)))
    Hp = H + 3
    x_flat = x_pad.reshape(N, C_in, Hp * Wp)
    L = H * Wp
    w_taps = jnp.transpose(weight, (2, 3, 0, 1)).reshape(9, C_out, C_in)
    b2 = bias.reshape(C_out, 1)

    out_flat = pl.pallas_call(
        functools.partial(_conv3x3_kernel, act=act, length=L, wp=Wp),
        out_shape=jax.ShapeDtypeStruct((N, C_out, L), x.dtype),
        grid_spec=pltpu.PrefetchScalarGridSpec(
            num_scalar_prefetch=0,
            grid=(N,),
            in_specs=[
                pl.BlockSpec((None, C_in, Hp * Wp), lambda n: (n, 0, 0)),
                pl.BlockSpec((9, C_out, C_in), lambda n: (0, 0, 0)),
                pl.BlockSpec((C_out, 1), lambda n: (0, 0)),
            ],
            out_specs=pl.BlockSpec((None, C_out, L), lambda n: (n, 0, 0)),
        ),
        compiler_params=pltpu.CompilerParams(dimension_semantics=("parallel",)),
    )(x_flat, w_taps, b2)

    return out_flat.reshape(N, C_out, H, Wp)[:, :, :, :W]


# ---------------------------------------------------------------------------
# Spatial IRNN: directional recurrent sweeps h_t = ReLU(x_t + w_c*h_{t-1} + b_c).
# One kernel does the forward + backward scan along axis 2 (the sublane axis).
# ---------------------------------------------------------------------------
def _irnn_scan_kernel(x_ref, wf_ref, bf_ref, wb_ref, bb_ref, fwd_ref, bwd_ref):
    # x_ref: (C, L, Wl); params: (C, 1, 1); outputs: (C, L, Wl)
    L = x_ref.shape[1]
    wf = wf_ref[...]
    bf = bf_ref[...]
    wb = wb_ref[...]
    bb = bb_ref[...]

    # forward scan: h_i = relu(x_i + wf*h_{i-1} + bf), h_{-1} = 0
    h0 = jnp.maximum(x_ref[:, pl.ds(0, 1), :] + bf, 0.0)
    fwd_ref[:, pl.ds(0, 1), :] = h0.astype(fwd_ref.dtype)

    def fwd_body(i, h):
        hn = jnp.maximum(x_ref[:, pl.ds(i, 1), :] + wf * h + bf, 0.0)
        fwd_ref[:, pl.ds(i, 1), :] = hn.astype(fwd_ref.dtype)
        return hn

    lax.fori_loop(1, L, fwd_body, h0)

    # backward scan: h_i = relu(x_i + wb*h_{i+1} + bb), h_{L} = 0
    hL = jnp.maximum(x_ref[:, pl.ds(L - 1, 1), :] + bb, 0.0)
    bwd_ref[:, pl.ds(L - 1, 1), :] = hL.astype(bwd_ref.dtype)

    def bwd_body(k, h):
        i = L - 1 - k
        hn = jnp.maximum(x_ref[:, pl.ds(i, 1), :] + wb * h + bb, 0.0)
        bwd_ref[:, pl.ds(i, 1), :] = hn.astype(bwd_ref.dtype)
        return hn

    lax.fori_loop(1, L, bwd_body, hL)


def irnn_scan_pallas(x, w_fwd, b_fwd, w_bwd, b_bwd):
    """Forward and backward IRNN scans along axis 2 of x: (N, C, L, Wl) -> (fwd, bwd)."""
    N, C, L, Wl = x.shape
    pf = lambda v: v.reshape(C, 1, 1)
    x_spec = pl.BlockSpec((None, C, L, Wl), lambda n: (n, 0, 0, 0))
    p_spec = pl.BlockSpec((C, 1, 1), lambda n: (0, 0, 0))
    return pl.pallas_call(
        _irnn_scan_kernel,
        out_shape=(jax.ShapeDtypeStruct((N, C, L, Wl), x.dtype),
                   jax.ShapeDtypeStruct((N, C, L, Wl), x.dtype)),
        grid_spec=pltpu.PrefetchScalarGridSpec(
            num_scalar_prefetch=0,
            grid=(N,),
            in_specs=[x_spec, p_spec, p_spec, p_spec, p_spec],
            out_specs=(x_spec, x_spec),
        ),
        compiler_params=pltpu.CompilerParams(dimension_semantics=("parallel",)),
    )(x, pf(w_fwd), pf(b_fwd), pf(w_bwd), pf(b_bwd))


def spacial_irnn_pallas(x, w_up, b_up, w_right, b_right, w_down, b_down, w_left, b_left):
    # TODO(synk): the reference `irnn` CUDA op is not provided; we implement the standard
    # IRNN recurrence h_t = ReLU(x_t + w_c*h_{t-1} + b_c) swept in each of the 4 directions.
    down, up = irnn_scan_pallas(x, w_down, b_down, w_up, b_up)          # scans along H
    # Horizontal scans reuse the same kernel on an H<->W transposed view (plain-JAX glue).
    xt = jnp.swapaxes(x, 2, 3)
    right_t, left_t = irnn_scan_pallas(xt, w_right, b_right, w_left, b_left)
    right = jnp.swapaxes(right_t, 2, 3)
    left = jnp.swapaxes(left_t, 2, 3)
    return up, right, down, left


# ---------------------------------------------------------------------------
# Module forward
# ---------------------------------------------------------------------------
def attention_forward(x, p):
    a = conv3x3_pallas(x, p["att1_w"], p["att1_b"], act="relu")
    a = conv3x3_pallas(a, p["att2_w"], p["att2_b"], act="relu")
    return conv1x1_pallas(a, p["att3_w"], bias=p["att3_b"], act="sigmoid")


def dsc_module_forward(x, p, attention=True):
    if attention:
        # Computed (as in the reference), but the reference's out-of-place Tensor.mul(...)
        # discards the result, so the attention map never touches the data path.
        _ = attention_forward(x, p)
    out = conv1x1_pallas(x, p["conv_in_w"])
    tu, tr, td, tl = spacial_irnn_pallas(out, *p["irnn1"])
    out = jnp.concatenate([tu, tr, td, tl], axis=1)
    out = conv1x1_pallas(out, p["conv2_w"])
    tu, tr, td, tl = spacial_irnn_pallas(out, *p["irnn2"])
    out = jnp.concatenate([tu, tr, td, tl], axis=1)
    return conv1x1_pallas(out, p["conv3_w"], act="relu")


# ---------------------------------------------------------------------------
# Plain-JAX references (for the in-script correctness check)
# ---------------------------------------------------------------------------
def _conv1x1_ref(x, w, b=None):
    y = jnp.einsum("nchw,oc->nohw", x, w.reshape(w.shape[0], -1))
    if b is not None:
        y = y + b.reshape(1, -1, 1, 1)
    return y


def _conv3x3_ref(x, w, b):
    y = lax.conv_general_dilated(x, w, (1, 1), ((1, 1), (1, 1)),
                                 dimension_numbers=("NCHW", "OIHW", "NCHW"))
    return y + b.reshape(1, -1, 1, 1)


def _irnn_ref(x, w_up, b_up, w_right, b_right, w_down, b_down, w_left, b_left):
    N, C, H, W = x.shape
    cv = lambda v: v.reshape(1, C, 1)
    rows = [jnp.maximum(x[:, :, 0, :] + cv(b_down), 0.0)]
    for i in range(1, H):
        rows.append(jnp.maximum(x[:, :, i, :] + cv(w_down) * rows[-1] + cv(b_down), 0.0))
    down = jnp.stack(rows, axis=2)
    rows = [jnp.maximum(x[:, :, H - 1, :] + cv(b_up), 0.0)]
    for i in range(H - 2, -1, -1):
        rows.append(jnp.maximum(x[:, :, i, :] + cv(w_up) * rows[-1] + cv(b_up), 0.0))
    up = jnp.stack(rows[::-1], axis=2)
    cols = [jnp.maximum(x[:, :, :, 0] + cv(b_right), 0.0)]
    for j in range(1, W):
        cols.append(jnp.maximum(x[:, :, :, j] + cv(w_right) * cols[-1] + cv(b_right), 0.0))
    right = jnp.stack(cols, axis=3)
    cols = [jnp.maximum(x[:, :, :, W - 1] + cv(b_left), 0.0)]
    for j in range(W - 2, -1, -1):
        cols.append(jnp.maximum(x[:, :, :, j] + cv(w_left) * cols[-1] + cv(b_left), 0.0))
    left = jnp.stack(cols[::-1], axis=3)
    return up, right, down, left


def _attention_ref(x, p):
    a = jnp.maximum(_conv3x3_ref(x, p["att1_w"], p["att1_b"]), 0.0)
    a = jnp.maximum(_conv3x3_ref(a, p["att2_w"], p["att2_b"]), 0.0)
    return jax.nn.sigmoid(_conv1x1_ref(a, p["att3_w"], p["att3_b"]))


def _dsc_ref(x, p):
    out = _conv1x1_ref(x, p["conv_in_w"])
    tu, tr, td, tl = _irnn_ref(out, *p["irnn1"])
    out = jnp.concatenate([tu, tr, td, tl], axis=1)
    out = _conv1x1_ref(out, p["conv2_w"])
    tu, tr, td, tl = _irnn_ref(out, *p["irnn2"])
    out = jnp.concatenate([tu, tr, td, tl], axis=1)
    return jnp.maximum(_conv1x1_ref(out, p["conv3_w"]), 0.0)


if __name__ == "__main__":
    key = jax.random.PRNGKey(0)
    keys = jax.random.split(key, 16)

    N, C, H, W = 2, 32, 16, 16          # DSC_Module(in_channels=32, out_channels=32)
    half = C // 2
    alpha = 1.0

    x = jax.random.normal(keys[0], (N, C, H, W), dtype=jnp.float32)

    def uinit(k, shape, fan_in):
        bound = 1.0 / math.sqrt(fan_in)
        return jax.random.uniform(k, shape, jnp.float32, -bound, bound)

    def irnn_params(k):
        ks = jax.random.split(k, 4)
        w = jnp.full((C,), alpha, dtype=jnp.float32)
        # grouped-1x1-conv biases in the reference; kept modest so the alpha=1 scans stay tame
        b_up, b_right, b_down, b_left = (
            jax.random.uniform(kk, (C,), jnp.float32, -0.5, 0.5) for kk in ks)
        return (w, b_up, w, b_right, w, b_down, w, b_left)

    params = {
        "conv_in_w": uinit(keys[1], (C, C), C),           # conv1x1, bias=False
        "conv2_w":   uinit(keys[2], (C, 4 * C), 4 * C),   # conv1x1, bias=False
        "conv3_w":   uinit(keys[3], (C, 4 * C), 4 * C),   # conv1x1, bias=False
        "att1_w": uinit(keys[4], (half, C, 3, 3), C * 9),
        "att1_b": uinit(keys[5], (half,), C * 9),
        "att2_w": uinit(keys[6], (half, half, 3, 3), half * 9),
        "att2_b": uinit(keys[7], (half,), half * 9),
        "att3_w": uinit(keys[8], (4, half), half),
        "att3_b": uinit(keys[9], (4,), half),
        "irnn1": irnn_params(keys[10]),
        "irnn2": irnn_params(keys[11]),
    }

    # attention branch (computed by the module; its result never touches the data path)
    att = jax.block_until_ready(attention_forward(x, params))
    att_ref = _attention_ref(x, params)
    assert att.shape == (N, 4, H, W)
    assert jnp.allclose(att, att_ref, atol=2e-2, rtol=2e-2)

    # full DSC_Module forward
    y = jax.block_until_ready(dsc_module_forward(x, params))
    ref = _dsc_ref(x, params)
    assert y.shape == (N, C, H, W)
    # tolerance allows for MXU f32 pass decomposition differing from the XLA reference
    assert jnp.allclose(y, ref, atol=2e-1, rtol=5e-2)

    print("KERNEL_OK")
</pallas_src>

<mosaic_0001>
module attributes {stable_mosaic.version = 11 : i64} {
  func.func @_conv3x3_kernel(%arg0: i32, %arg1: memref<1x32x342xf32, #tpu.memory_space<vmem>>, %arg2: memref<9x16x32xf32, #tpu.memory_space<vmem>>, %arg3: memref<16x1xf32, #tpu.memory_space<vmem>>, %arg4: memref<1x16x288xf32, #tpu.memory_space<vmem>>) attributes {dimension_semantics = [#tpu.dimension_semantics<parallel>], iteration_bounds = array<i64: 2>, scalar_prefetch = 0 : i64, scratch_operands = 0 : i64, tpu.core_type = #tpu.core_type<tc>, window_params = [{transform_indices = @transform_0, window_bounds = array<i64: 1, 32, 342>}, {pipeline_mode = #tpu.pipeline_mode<synchronous>, transform_indices = @transform_1, window_bounds = array<i64: 9, 16, 32>}, {pipeline_mode = #tpu.pipeline_mode<synchronous>, transform_indices = @transform_2, window_bounds = array<i64: 16, 1>}, {transform_indices = @transform_3, window_bounds = array<i64: 1, 16, 288>}]} {
    %c0 = arith.constant 0 : index
    %c0_0 = arith.constant 0 : index
    %c0_1 = arith.constant 0 : index
    %0 = vector.load %arg1[%c0, %c0_0, %c0_1] : memref<1x32x342xf32, #tpu.memory_space<vmem>>, vector<1x32x342xf32>
    %1 = vector.shape_cast %0 : vector<1x32x342xf32> to vector<32x342xf32>
    %cst = arith.constant 0.000000e+00 : f32
    %2 = vector.broadcast %cst : f32 to vector<16x288xf32>
    %c0_2 = arith.constant 0 : index
    %c0_3 = arith.constant 0 : index
    %c0_4 = arith.constant 0 : index
    %3 = vector.load %arg2[%c0_2, %c0_3, %c0_4] : memref<9x16x32xf32, #tpu.memory_space<vmem>>, vector<1x16x32xf32>
    %4 = vector.shape_cast %3 : vector<1x16x32xf32> to vector<16x32xf32>
    %5 = vector.extract_strided_slice %1 {offsets = [0, 0], sizes = [32, 288], strides = [1, 1]} : vector<32x342xf32> to vector<32x288xf32>
    %cst_5 = arith.constant dense<0.000000e+00> : vector<16x288xf32>
    %6 = tpu.matmul %4, %5, %cst_5 {dimension_numbers = #tpu.dot_dimension_numbers<[1], [0], [0], [1], [0, 0, 1, 1], [], []>} : vector<16x32xf32>, vector<32x288xf32>, vector<16x288xf32> -> vector<16x288xf32>
    %7 = arith.addf %2, %6 : vector<16x288xf32>
    %c1 = arith.constant 1 : index
    %c0_6 = arith.constant 0 : index
    %c0_7 = arith.constant 0 : index
    %8 = vector.load %arg2[%c1, %c0_6, %c0_7] : memref<9x16x32xf32, #tpu.memory_space<vmem>>, vector<1x16x32xf32>
    %9 = vector.shape_cast %8 : vector<1x16x32xf32> to vector<16x32xf32>
    %10 = vector.extract_strided_slice %1 {offsets = [0, 1], sizes = [32, 288], strides = [1, 1]} : vector<32x342xf32> to vector<32x288xf32>
    %cst_8 = arith.constant dense<0.000000e+00> : vector<16x288xf32>
    %11 = tpu.matmul %9, %10, %cst_8 {dimension_numbers = #tpu.dot_dimension_numbers<[1], [0], [0], [1], [0, 0, 1, 1], [], []>} : vector<16x32xf32>, vector<32x288xf32>, vector<16x288xf32> -> vector<16x288xf32>
    %12 = arith.addf %7, %11 : vector<16x288xf32>
    %c2 = arith.constant 2 : index
    %c0_9 = arith.constant 0 : index
    %c0_10 = arith.constant 0 : index
    %13 = vector.load %arg2[%c2, %c0_9, %c0_10] : memref<9x16x32xf32, #tpu.memory_space<vmem>>, vector<1x16x32xf32>
    %14 = vector.shape_cast %13 : vector<1x16x32xf32> to vector<16x32xf32>
    %15 = vector.extract_strided_slice %1 {offsets = [0, 2], sizes = [32, 288], strides = [1, 1]} : vector<32x342xf32> to vector<32x288xf32>
    %cst_11 = arith.constant dense<0.000000e+00> : vector<16x288xf32>
    %16 = tpu.matmul %14, %15, %cst_11 {dimension_numbers = #tpu.dot_dimension_numbers<[1], [0], [0], [1], [0, 0, 1, 1], [], []>} : vector<16x32xf32>, vector<32x288xf32>, vector<16x288xf32> -> vector<16x288xf32>
    %17 = arith.addf %12, %16 : vector<16x288xf32>
    %c3 = arith.constant 3 : index
    %c0_12 = arith.constant 0 : index
    %c0_13 = arith.constant 0 : index
    %18 = vector.load %arg2[%c3, %c0_12, %c0_13] : memref<9x16x32xf32, #tpu.memory_space<vmem>>, vector<1x16x32xf32>
    %19 = vector.shape_cast %18 : vector<1x16x32xf32> to vector<16x32xf32>
    %20 = vector.extract_strided_slice %1 {offsets = [0, 18], sizes = [32, 288], strides = [1, 1]} : vector<32x342xf32> to vector<32x288xf32>
    %cst_14 = arith.constant dense<0.000000e+00> : vector<16x288xf32>
    %21 = tpu.matmul %19, %20, %cst_14 {dimension_numbers = #tpu.dot_dimension_numbers<[1], [0], [0], [1], [0, 0, 1, 1], [], []>} : vector<16x32xf32>, vector<32x288xf32>, vector<16x288xf32> -> vector<16x288xf32>
    %22 = arith.addf %17, %21 : vector<16x288xf32>
    %c4 = arith.constant 4 : index
    %c0_15 = arith.constant 0 : index
    %c0_16 = arith.constant 0 : index
    %23 = vector.load %arg2[%c4, %c0_15, %c0_16] : memref<9x16x32xf32, #tpu.memory_space<vmem>>, vector<1x16x32xf32>
    %24 = vector.shape_cast %23 : vector<1x16x32xf32> to vector<16x32xf32>
    %25 = vector.extract_strided_slice %1 {offsets = [0, 19], sizes = [32, 288], strides = [1, 1]} : vector<32x342xf32> to vector<32x288xf32>
    %cst_17 = arith.constant dense<0.000000e+00> : vector<16x288xf32>
    %26 = tpu.matmul %24, %25, %cst_17 {dimension_numbers = #tpu.dot_dimension_numbers<[1], [0], [0], [1], [0, 0, 1, 1], [], []>} : vector<16x32xf32>, vector<32x288xf32>, vector<16x288xf32> -> vector<16x288xf32>
    %27 = arith.addf %22, %26 : vector<16x288xf32>
    %c5 = arith.constant 5 : index
    %c0_18 = arith.constant 0 : index
    %c0_19 = arith.constant 0 : index
    %28 = vector.load %arg2[%c5, %c0_18, %c0_19] : memref<9x16x32xf32, #tpu.memory_space<vmem>>, vector<1x16x32xf32>
    %29 = vector.shape_cast %28 : vector<1x16x32xf32> to vector<16x32xf32>
    %30 = vector.extract_strided_slice %1 {offsets = [0, 20], sizes = [32, 288], strides = [1, 1]} : vector<32x342xf32> to vector<32x288xf32>
    %cst_20 = arith.constant dense<0.000000e+00> : vector<16x288xf32>
    %31 = tpu.matmul %29, %30, %cst_20 {dimension_numbers = #tpu.dot_dimension_numbers<[1], [0], [0], [1], [0, 0, 1, 1], [], []>} : vector<16x32xf32>, vector<32x288xf32>, vector<16x288xf32> -> vector<16x288xf32>
    %32 = arith.addf %27, %31 : vector<16x288xf32>
    %c6 = arith.constant 6 : index
    %c0_21 = arith.constant 0 : index
    %c0_22 = arith.constant 0 : index
    %33 = vector.load %arg2[%c6, %c0_21, %c0_22] : memref<9x16x32xf32, #tpu.memory_space<vmem>>, vector<1x16x32xf32>
    %34 = vector.shape_cast %33 : vector<1x16x32xf32> to vector<16x32xf32>
    %35 = vector.extract_strided_slice %1 {offsets = [0, 36], sizes = [32, 288], strides = [1, 1]} : vector<32x342xf32> to vector<32x288xf32>
    %cst_23 = arith.constant dense<0.000000e+00> : vector<16x288xf32>
    %36 = tpu.matmul %34, %35, %cst_23 {dimension_numbers = #tpu.dot_dimension_numbers<[1], [0], [0], [1], [0, 0, 1, 1], [], []>} : vector<16x32xf32>, vector<32x288xf32>, vector<16x288xf32> -> vector<16x288xf32>
    %37 = arith.addf %32, %36 : vector<16x288xf32>
    %c7 = arith.constant 7 : index
    %c0_24 = arith.constant 0 : index
    %c0_25 = arith.constant 0 : index
    %38 = vector.load %arg2[%c7, %c0_24, %c0_25] : memref<9x16x32xf32, #tpu.memory_space<vmem>>, vector<1x16x32xf32>
    %39 = vector.shape_cast %38 : vector<1x16x32xf32> to vector<16x32xf32>
    %40 = vector.extract_strided_slice %1 {offsets = [0, 37], sizes = [32, 288], strides = [1, 1]} : vector<32x342xf32> to vector<32x288xf32>
    %cst_26 = arith.constant dense<0.000000e+00> : vector<16x288xf32>
    %41 = tpu.matmul %39, %40, %cst_26 {dimension_numbers = #tpu.dot_dimension_numbers<[1], [0], [0], [1], [0, 0, 1, 1], [], []>} : vector<16x32xf32>, vector<32x288xf32>, vector<16x288xf32> -> vector<16x288xf32>
    %42 = arith.addf %37, %41 : vector<16x288xf32>
    %c8 = arith.constant 8 : index
    %c0_27 = arith.constant 0 : index
    %c0_28 = arith.constant 0 : index
    %43 = vector.load %arg2[%c8, %c0_27, %c0_28] : memref<9x16x32xf32, #tpu.memory_space<vmem>>, vector<1x16x32xf32>
    %44 = vector.shape_cast %43 : vector<1x16x32xf32> to vector<16x32xf32>
    %45 = vector.extract_strided_slice %1 {offsets = [0, 38], sizes = [32, 288], strides = [1, 1]} : vector<32x342xf32> to vector<32x288xf32>
    %cst_29 = arith.constant dense<0.000000e+00> : vector<16x288xf32>
    %46 = tpu.matmul %44, %45, %cst_29 {dimension_numbers = #tpu.dot_dimension_numbers<[1], [0], [0], [1], [0, 0, 1, 1], [], []>} : vector<16x32xf32>, vector<32x288xf32>, vector<16x288xf32> -> vector<16x288xf32>
    %47 = arith.addf %42, %46 : vector<16x288xf32>
    %c0_30 = arith.constant 0 : index
    %c0_31 = arith.constant 0 : index
    %48 = vector.load %arg3[%c0_30, %c0_31] : memref<16x1xf32, #tpu.memory_space<vmem>>, vector<16x1xf32>
    %49 = vector.broadcast %48 : vector<16x1xf32> to vector<16x288xf32>
    %50 = arith.addf %47, %49 : vector<16x288xf32>
    %cst_32 = arith.constant 0.000000e+00 : f32
    %51 = vector.broadcast %cst_32 : f32 to vector<16x288xf32>
    %52 = arith.maximumf %50, %51 : vector<16x288xf32>
    %c0_33 = arith.constant 0 : index
    %c0_34 = arith.constant 0 : index
    %c0_35 = arith.constant 0 : index
    %53 = vector.load %arg4[%c0_33, %c0_34, %c0_35] : memref<1x16x288xf32, #tpu.memory_space<vmem>>, vector<1x16x288xf32>
    %54 = vector.shape_cast %53 : vector<1x16x288xf32> to vector<16x288xf32>
    %55 = vector.shape_cast %52 : vector<16x288xf32> to vector<1x16x288xf32>
    tpu.vector_store %arg4[%c0_33, %c0_34, %c0_35], %55 {strides = array<i32>} : memref<1x16x288xf32, #tpu.memory_space<vmem>>, vector<1x16x288xf32>,
    return
  }
  func.func @transform_0(%arg0: i32) -> (i32, i32, i32) {
    %c0_i32 = arith.constant 0 : i32
    %c0_i32_0 = arith.constant 0 : i32
    %c0_i32_1 = arith.constant 0 : i32
    return %arg0, %c0_i32, %c0_i32_0 : i32, i32, i32
  }
  func.func @transform_1(%arg0: i32) -> (i32, i32, i32) {
    %c0_i32 = arith.constant 0 : i32
    %c0_i32_0 = arith.constant 0 : i32
    %c0_i32_1 = arith.constant 0 : i32
    %c0_i32_2 = arith.constant 0 : i32
    return %c0_i32, %c0_i32_0, %c0_i32_1 : i32, i32, i32
  }
  func.func @transform_2(%arg0: i32) -> (i32, i32) {
    %c0_i32 = arith.constant 0 : i32
    %c0_i32_0 = arith.constant 0 : i32
    %c0_i32_1 = arith.constant 0 : i32
    return %c0_i32, %c0_i32_0 : i32, i32
  }
  func.func @transform_3(%arg0: i32) -> (i32, i32, i32) {
    %c0_i32 = arith.constant 0 : i32
    %c0_i32_0 = arith.constant 0 : i32
    %c0_i32_1 = arith.constant 0 : i32
    return %arg0, %c0_i32, %c0_i32_0 : i32, i32, i32
  }
}

</mosaic_0001>

<llo_original>
// kernel: tpu_custom_call.1
$region0: #{tpu_custom_call.1}
  #allocation0 [shape = 'u32[]', space=smem, size = 0x4, offset = 0x4, fixed_abs, tag = 'smem constant byte address 0x4 - core index']
  #allocation1 [shape = 'u32[144,128]{1,0:T(1,128)}', space=vmem, size = 0x12000, scoped, tag = 'internal scratch']
  %s0 = inlined_call_operand.hbm [shape: f32[2,32,342], index: 0, kind: input, shape index: {}]
  %s1 = inlined_call_operand.hbm [shape: f32[9,16,32], index: 1, kind: input, shape index: {}]
  %s2 = inlined_call_operand.vmem [shape: f32[16,1], index: 2, kind: input, shape index: {}]
  %s3 = inlined_call_operand.hbm [shape: f32[2,16,288], index: 3, kind: output, shape index: {}]
  %s4 = sld [smem:[#allocation0]]
  $region53: #{tpu_custom_call.1} parent=0
    _
  %s6 = ssub.s32 1, %s4
  %s7 = scalar_select 0, %s6, %s4
  $region1: #{tpu_custom_call.1} parent=0
    #allocation2 [shape = 'u8[98304]{0}', space=vmem, size = 0x18000, scoped, tag = 'input window, operand 0']
    #allocation3 [shape = 's32[2]{0}', space=sflag, size = 0x8, scoped, tag = 'scoped memory for tpu_custom_call.1']
    #allocation4 [shape = 's32[2]{0}', space=sflag, size = 0x8, scoped, tag = 'scoped memory for tpu_custom_call.1']
    #allocation5 [shape = 'u8[73728]{0}', space=vmem, size = 0x12000, scoped, tag = 'input window, operand 1, single buffered']
    #allocation6 [shape = 's32[1]{0}', space=sflag, size = 0x4, scoped, tag = 'scoped memory for tpu_custom_call.1']
    #allocation7 [shape = 'u8[49152]{0}', space=vmem, size = 0xc000, scoped, tag = 'output window, operand 0']
    %8 = vsyncpa [#allocation3], 0
    %s9 = scalar_lea.sflag [#allocation3], 1
    %10 = vsyncpa %s9, 0
    %11 = vsyncpa [#allocation6], 0
    %12 = vsyncpa [#allocation4], 0
    %s13 = scalar_lea.sflag [#allocation4], 1
    %14 = vsyncpa %s13, 0
    loop: start=0, step=1, limit=4
    $region2: #{tpu_custom_call.1} parent=1 // loop_pre_header
      _
    $region3: #{tpu_custom_call.1} parent=1 // loop_header
      %s16 = sphi 0, %s20
      %p17 = scmp.ge.s32.totalorder %s16, 4
      %s26 = sphi 0, %s28
      %s29 = sphi 0, %s26
      %s30 = sphi 0, %s29
      %s46 = sphi 0, %s30
      %s50 = sphi 0, %s50
      %s52 = sphi 0, %s50
      %s53 = sphi 0, %s52
      %s67 = sphi 0, %s53
      %s71 = sphi 0, %s71
      %s73 = sphi 0, %s71
      %s74 = sphi 0, %s73
      %s88 = sphi 0, %s74
      %s94 = sphi 0, %s96
      %s97 = sphi 0, %s94
      %s98 = sphi 0, %s97
      %s114 = sphi 0, %s98
    $region4: #{tpu_custom_call.1} parent=1 // loop_header_branch
      %19 = sbr.rel (%p17) target = $region8
    $region5: #{tpu_custom_call.1} parent=1 // loop_body
      %s21 = ssub.s32 %s16, 1
      %s22 = ssub.s32 %s16, 2
      %s23 = sadd.s32 %s16, 1
      %s24 = ssub.s32 %s16, %s23
      %p25 = scmp.eq.s32.totalorder %s24, 0
      %s27 = sadd.s32 %s26, 1
      %s28 = scalar_select %p25, %s26, %s27
      %p31 = pneg %p25
      %p32 = scmp.eq.s32.totalorder %s16, 1
      %p33 = por %p31, %p32
      %p34 = scmp.ne.s32.totalorder %s26, %s29
      %p35 = scmp.eq.s32.totalorder %s16, 0
      %p36 = por %p34, %p35
      %p37 = scmp.ne.s32.totalorder %s26, %s29
      %p38 = scmp.eq.s32.totalorder %s21, 1
      %p39 = por %p37, %p38
      %p40 = scmp.ne.s32.totalorder %s29, %s30
      %p41 = scmp.eq.s32.totalorder %s21, 0
      %p42 = por %p40, %p41
      %p43 = scmp.ne.s32.totalorder %s29, %s30
      %p44 = scmp.eq.s32.totalorder %s22, 1
      %p45 = por %p43, %p44
      %p47 = scmp.ne.s32.totalorder %s30, %s46
      %p48 = scmp.eq.s32.totalorder %s22, 0
      %p49 = por %p47, %p48
      %s51 = sadd.s32 %s50, 1
      %p54 = scmp.eq.s32.totalorder %s16, 1
      %p55 = scmp.ne.s32.totalorder %s50, %s52
      %p56 = scmp.eq.s32.totalorder %s16, 0
      %p57 = por %p55, %p56
      %p58 = scmp.ne.s32.totalorder %s50, %s52
      %p59 = scmp.eq.s32.totalorder %s21, 1
      %p60 = por %p58, %p59
      %p61 = scmp.ne.s32.totalorder %s52, %s53
      %p62 = scmp.eq.s32.totalorder %s21, 0
      %p63 = por %p61, %p62
      %p64 = scmp.ne.s32.totalorder %s52, %s53
      %p65 = scmp.eq.s32.totalorder %s22, 1
      %p66 = por %p64, %p65
      %p68 = scmp.ne.s32.totalorder %s53, %s67
      %p69 = scmp.eq.s32.totalorder %s22, 0
      %p70 = por %p68, %p69
      %s72 = sadd.s32 %s71, 1
      %p75 = scmp.eq.s32.totalorder %s16, 1
      %p76 = scmp.ne.s32.totalorder %s71, %s73
      %p77 = scmp.eq.s32.totalorder %s16, 0
      %p78 = por %p76, %p77
      %p79 = scmp.ne.s32.totalorder %s71, %s73
      %p80 = scmp.eq.s32.totalorder %s21, 1
      %p81 = por %p79, %p80
      %p82 = scmp.ne.s32.totalorder %s73, %s74
      %p83 = scmp.eq.s32.totalorder %s21, 0
      %p84 = por %p82, %p83
      %p85 = scmp.ne.s32.totalorder %s73, %s74
      %p86 = scmp.eq.s32.totalorder %s22, 1
      %p87 = por %p85, %p86
      %p89 = scmp.ne.s32.totalorder %s74, %s88
      %p90 = scmp.eq.s32.totalorder %s22, 0
      %p91 = por %p89, %p90
      %s92 = ssub.s32 %s16, %s23
      %p93 = scmp.eq.s32.totalorder %s92, 0
      %s95 = sadd.s32 %s94, 1
      %s96 = scalar_select %p93, %s94, %s95
      %p99 = pneg %p93
      %p100 = scmp.eq.s32.totalorder %s16, 1
      %p101 = por %p99, %p100
      %p102 = scmp.ne.s32.totalorder %s94, %s97
      %p103 = scmp.eq.s32.totalorder %s16, 0
      %p104 = por %p102, %p103
      %p105 = scmp.ne.s32.totalorder %s94, %s97
      %p106 = scmp.eq.s32.totalorder %s21, 1
      %p107 = por %p105, %p106
      %p108 = scmp.ne.s32.totalorder %s97, %s98
      %p109 = scmp.eq.s32.totalorder %s21, 0
      %p110 = por %p108, %p109
      %p111 = scmp.ne.s32.totalorder %s97, %s98
      %p112 = scmp.eq.s32.totalorder %s22, 1
      %p113 = por %p111, %p112
      %p115 = scmp.ne.s32.totalorder %s98, %s114
      %p116 = scmp.eq.s32.totalorder %s22, 0
      %p117 = por %p115, %p116
      %p118 = scmp.le.s32.totalorder 1, %s16
      %p119 = scmp.lt.s32.totalorder %s16, 3
      %p120 = pnand %p118, %p119
      %p121 = pneg %p120
      // Predicated region
      $region9: #{tpu_custom_call.1} parent=5 // pred_check
        _
      $region10: #{tpu_custom_call.1} parent=5 // pred_check_branch
        %123 = sbr.rel (%p120) target = $region12
      $region11: #{tpu_custom_call.1} parent=5 // pred_region
        %s124 = ssub.s32 %s16, 1
        // Predicated region
        $region13: #{tpu_custom_call.1} parent=11 // pred_check
          %p125 = pneg %p63
        $region14: #{tpu_custom_call.1} parent=11 // pred_check_branch
          %127 = sbr.rel (%p125) target = $region16
        $region15: #{tpu_custom_call.1} parent=11 // pred_region
          %s129 = ssub.s32 2304, 2304
          %130 = vsyncadd [#allocation6], %s129
          %s131 = sshll.u32 [#allocation5], 4
          %s132 = int_to_ptr.vmem [resolvable:$true] %s131
          %137 = dma.hbm_to_vmem [thread:$0]  %s1, 2304, %s132, [#allocation6], 128, 128, 8
        $region16: #{tpu_custom_call.1} parent=11 // pred_fallthru
          _
        // Predicated region
        $region17: #{tpu_custom_call.1} parent=11 // pred_check
          %p138 = pneg %p84
        $region18: #{tpu_custom_call.1} parent=11 // pred_check_branch
          %140 = sbr.rel (%p138) target = $region20
        $region19: #{tpu_custom_call.1} parent=11 // pred_region
          _
        $region20: #{tpu_custom_call.1} parent=11 // pred_fallthru
          _
      $region12: #{tpu_custom_call.1} parent=5 // pred_fallthru
        _
      %p141 = scmp.lt.s32.totalorder %s16, 2
      // Predicated region
      $region21: #{tpu_custom_call.1} parent=5 // pred_check
        %p142 = pneg %p141
      $region22: #{tpu_custom_call.1} parent=5 // pred_check_branch
        %144 = sbr.rel (%p142) target = $region24
      $region23: #{tpu_custom_call.1} parent=5 // pred_region
        // Predicated region
        $region25: #{tpu_custom_call.1} parent=23 // pred_check
          %p145 = pneg %p36
        $region26: #{tpu_custom_call.1} parent=23 // pred_check_branch
          %147 = sbr.rel (%p145) target = $region28
        $region27: #{tpu_custom_call.1} parent=23 // pred_region
          %s148 = sand.u32 %s26, 1
          %s149 = scalar_lea.sflag [#allocation3], %s148
          %s150 = sand.u32 %s26, 1
          %s151 = smul.addr %s150, 96
          %s152 = scalar_lea.vmem [#allocation2], %s151
          %s154 = ssub.s32 1536, 1536
          %155 = vsyncadd %s149, %s154
          %s156 = smul.addr %s16, 12
          %s157 = smul.addr %s156, 128
          %s158 = scalar_lea.hbm %s0, %s157
          %s159 = sshll.u32 %s152, 4
          %s160 = int_to_ptr.vmem [resolvable:$true] %s159
          %165 = dma.hbm_to_vmem [thread:$0]  %s158, 1536, %s160, %s149, 384, 384, 24
        $region28: #{tpu_custom_call.1} parent=23 // pred_fallthru
          _
      $region24: #{tpu_custom_call.1} parent=5 // pred_fallthru
        _
      %p166 = scmp.le.s32.totalorder 1, %s16
      %p167 = scmp.lt.s32.totalorder %s16, 3
      %p168 = pnand %p166, %p167
      %p169 = pneg %p168
      // Predicated region
      $region29: #{tpu_custom_call.1} parent=5 // pred_check
        _
      $region30: #{tpu_custom_call.1} parent=5 // pred_check_branch
        %171 = sbr.rel (%p168) target = $region32
      $region31: #{tpu_custom_call.1} parent=5 // pred_region
        %s172 = ssub.s32 %s16, 1
        %s173 = sand.u32 %s29, 1
        %s174 = scalar_lea.sflag [#allocation3], %s173
        %s175 = sand.u32 %s29, 1
        %s176 = smul.addr %s175, 96
        %s177 = scalar_lea.vmem [#allocation2], %s176
        // Predicated region
        $region33: #{tpu_custom_call.1} parent=31 // pred_check
          %p178 = pneg %p42
        $region34: #{tpu_custom_call.1} parent=31 // pred_check_branch
          %180 = sbr.rel (%p178) target = $region36
        $region35: #{tpu_custom_call.1} parent=31 // pred_region
          %181 = dma.done %s174, 1536
        $region36: #{tpu_custom_call.1} parent=31 // pred_fallthru
          _
        // Predicated region
        $region37: #{tpu_custom_call.1} parent=31 // pred_check
          %p182 = pneg %p63
        $region38: #{tpu_custom_call.1} parent=31 // pred_check_branch
          %184 = sbr.rel (%p182) target = $region40
        $region39: #{tpu_custom_call.1} parent=31 // pred_region
          %185 = dma.done [#allocation6], 2304
        $region40: #{tpu_custom_call.1} parent=31 // pred_fallthru
          _
        %s186 = sand.u32 %s29, 1
        %s187 = scalar_lea.sflag [#allocation3], %s186
        %s188 = sand.u32 %s29, 1
        %s189 = smul.addr %s188, 96
        %s190 = scalar_lea.vmem [#allocation2], %s189
        %p191 = pneg %p42
        %p192 = pneg %p39
        %p193 = pneg %p63
        %p194 = pneg %p60
        %p195 = pneg %p84
        %p196 = pneg %p81
        %p197 = pneg %p110
        %p198 = pneg %p107
        %s199 = sand.u32 %s97, 1
        %s200 = scalar_lea.sflag [#allocation4], %s199
        %s201 = sand.u32 %s97, 1
        %s202 = smul.addr %s201, 48
        %s203 = scalar_lea.vmem [#allocation7], %s202
        %v204 = vld [vmem:[%s177] sm:$0xff]
        %v205 = vld [vmem:[%s177 + $0x8] sm:$0xff]
        %v206 = vld [vmem:[%s177 + $0x10] sm:$0xff]
        %v207 = vld [vmem:[%s177 + $0x18] sm:$0xff]
        %v208 = vld [vmem:[%s177 + $0x20] sm:$0xff]
        %v209 = vld [vmem:[%s177 + $0x28] sm:$0xff]
        %v210 = vld [vmem:[%s177 + $0x30] sm:$0xff]
        %v211 = vld [vmem:[%s177 + $0x38] sm:$0xff]
        %v212 = vld [vmem:[%s177 + $0x40] sm:$0xff]
        %v213 = vld [vmem:[%s177 + $0x48] sm:$0xff]
        %v214 = vld [vmem:[%s177 + $0x50] sm:$0xff]
        %v215 = vld [vmem:[%s177 + $0x58] sm:$0xff]
        %v216 = vld [vmem:[#allocation5] sm:$0xff]
        %v217 = vld [vmem:[#allocation5 + $0x8] sm:$0xff]
        %s218 = scalar_lea.vmem [#allocation5], 16
        %v219 = vld [vmem:[%s218] sm:$0xff]
        %v220 = vld [vmem:[%s218 + $0x8] sm:$0xff]
        %233 = vrot.lane.b32.xlu0 %v204, 127
        %v234 = vpop.permute.xlu0 %233
        %235 = vrot.lane.b32.xlu0 %v205, 127
        %v236 = vpop.permute.xlu0 %235
        %237 = vrot.lane.b32.xlu0 %v206, 127
        %v238 = vpop.permute.xlu0 %237
        %239 = vrot.lane.b32.xlu0 %v207, 127
        %v240 = vpop.permute.xlu0 %239
        %241 = vrot.lane.b32.xlu0 %v208, 127
        %v242 = vpop.permute.xlu0 %241
        %243 = vrot.lane.b32.xlu0 %v209, 127
        %v244 = vpop.permute.xlu0 %243
        %245 = vrot.lane.b32.xlu0 %v210, 127
        %v246 = vpop.permute.xlu0 %245
        %247 = vrot.lane.b32.xlu0 %v211, 127
        %v248 = vpop.permute.xlu0 %247
        %249 = vrot.lane.b32.xlu0 %v212, 127
        %v250 = vpop.permute.xlu0 %249
        %251 = vrot.lane.b32.xlu0 %v213, 127
        %v252 = vpop.permute.xlu0 %251
        %253 = vrot.lane.b32.xlu0 %v214, 127
        %v254 = vpop.permute.xlu0 %253
        %255 = vrot.lane.b32.xlu0 %v215, 127
        %v256 = vpop.permute.xlu0 %255
        %vm257 = vcmask 1039360
        %v258 = vsel %vm257, %v234, %v236
        %v259 = vsel %vm257, %v236, %v238
        %v260 = vsel %vm257, %v240, %v242
        %v261 = vsel %vm257, %v242, %v244
        %v262 = vsel %vm257, %v246, %v248
        %v263 = vsel %vm257, %v248, %v250
        %v264 = vsel %vm257, %v252, %v254
        %v265 = vsel %vm257, %v254, %v256
        %vm278 = vcmask 261120
        %v280 = vsel %vm278, %v219, 0
        %v283 = vsel %vm278, %v220, 0
        %285 = vmatprep.subr.mxu0 %v259
        %286 = vmatpush1.msra.mxu0 %v258
        %287 = vmatprep.subr.mxu0 %v261
        %288 = vmatpush1.msra.mxu0 %v260
        %289 = vmatprep.subr.mxu0 %v263
        %290 = vmatpush1.msra.mxu0 %v262
        %291 = vmatprep.subr.mxu0 %v265
        %292 = vmatpush1.msra.mxu0 %v264
        %293 = vmatprep.subr.mxu0 0.0
        %294 = vmatpush1.msra.mxu0 0.0
        %295 = vmatprep.subr.mxu0 0.0
        %296 = vmatpush1.msra.mxu0 0.0
        %297 = vmatprep.subr.mxu0 0.0
        %298 = vmatpush1.msra.mxu0 0.0
        %299 = vmatprep.subr.mxu0 0.0
        %300 = vmatpush1.msra.mxu0 0.0
        %301 = vmatprep.subr.mxu0 0.0
        %302 = vmatpush1.msra.mxu0 0.0
        %303 = vmatprep.subr.mxu0 0.0
        %304 = vmatpush1.msra.mxu0 0.0
        %305 = vmatprep.subr.mxu0 0.0
        %306 = vmatpush1.msra.mxu0 0.0
        %307 = vmatprep.subr.mxu0 0.0
        %308 = vmatpush1.msra.mxu0 0.0
        %309 = vmatprep.subr.mxu0 0.0
        %310 = vmatpush1.msra.mxu0 0.0
        %311 = vmatprep.subr.mxu0 0.0
        %312 = vmatpush1.msra.mxu0 0.0
        %313 = vmatprep.subr.mxu0 0.0
        %314 = vmatpush1.msra.mxu0 0.0
        %315 = vmatprep.subr.mxu0 0.0
        %316 = vmatpush1.msra.mxu0 0.0
        %317 = vmatprep.subr.mxu0 0.0
        %318 = vmatpush1.msra.mxu0 0.0
        %319 = vmatprep.subr.mxu0 0.0
        %320 = vmatpush1.msra.mxu0 0.0
        %321 = vmatprep.subr.mxu0 0.0
        %322 = vmatpush1.msra.mxu0 0.0
        %323 = vmatprep.subr.mxu0 0.0
        %324 = vmatpush1.msra.mxu0 0.0
        %325 = vmatprep.subr.mxu0 0.0
        %326 = vmatpush1.msra.mxu0 0.0
        %327 = vmatprep.subr.mxu0 0.0
        %328 = vmatpush1.msra.mxu0 0.0
        %329 = vmatprep.subr.mxu0 0.0
        %330 = vmatpush1.msra.mxu0 0.0
        %331 = vmatprep.subr.mxu0 0.0
        %332 = vmatpush1.msra.mxu0 0.0
        %333 = vmatprep.subr.mxu0 0.0
        %334 = vmatpush1.msra.mxu0 0.0
        %335 = vmatprep.subr.mxu0 0.0
        %336 = vmatpush1.msra.mxu0 0.0
        %337 = vmatprep.subr.mxu0 0.0
        %338 = vmatpush1.msra.mxu0 0.0
        %339 = vmatprep.subr.mxu0 0.0
        %340 = vmatpush1.msra.mxu0 0.0
        %341 = vmatprep.subr.mxu0 0.0
        %342 = vmatpush1.msra.mxu0 0.0
        %343 = vmatprep.subr.mxu0 0.0
        %344 = vmatpush1.msra.mxu0 0.0
        %345 = vmatprep.subr.mxu0 0.0
        %346 = vmatpush1.msra.mxu0 0.0
        %347 = vmatprep.subr.mxu0 0.0
        %348 = vmatpush1.msra.mxu0 0.0
        %349 = vmatprep.mubr.f32.mxu0 0.0
        %350 = vmatmul.mubr.f32.gmra.mrb[0].mxu0 %v280
        %v351 = vpop.f32.mrb[0].mxu0
        %v352 = vadd.f32 0.0, %v351
        %v353 = vpop.f32.mrb[0].mxu0
        %v354 = vadd.f32 0.0, %v353
        %355 = vmatprep.mubr.f32.mxu0 0.0
        %356 = vmatmul.mubr.f32.gmra.mrb[0].mxu0 %v283
        %v357 = vpop.f32.mrb[0].mxu0
        %v358 = vadd.f32 0.0, %v357
        %v359 = vpop.f32.mrb[0].mxu0
        %v360 = vadd.f32 0.0, %v359
        %361 = vdwg.mxu0
        %362 = vmatprep.subr.mxu0 0.0
        %363 = vmatpush1.msra.mxu0 %v238
        %364 = vmatprep.subr.mxu0 0.0
        %365 = vmatpush1.msra.mxu0 %v244
        %366 = vmatprep.subr.mxu0 0.0
        %367 = vmatpush1.msra.mxu0 %v250
        %368 = vmatprep.subr.mxu0 0.0
        %369 = vmatpush1.msra.mxu0 %v256
        %370 = vmatprep.subr.mxu0 0.0
        %371 = vmatpush1.msra.mxu0 0.0
        %372 = vmatprep.subr.mxu0 0.0
        %373 = vmatpush1.msra.mxu0 0.0
        %374 = vmatprep.subr.mxu0 0.0
        %375 = vmatpush1.msra.mxu0 0.0
        %376 = vmatprep.subr.mxu0 0.0
        %377 = vmatpush1.msra.mxu0 0.0
        %378 = vmatprep.subr.mxu0 0.0
        %379 = vmatpush1.msra.mxu0 0.0
        %380 = vmatprep.subr.mxu0 0.0
        %381 = vmatpush1.msra.mxu0 0.0
        %382 = vmatprep.subr.mxu0 0.0
        %383 = vmatpush1.msra.mxu0 0.0
        %384 = vmatprep.subr.mxu0 0.0
        %385 = vmatpush1.msra.mxu0 0.0
        %386 = vmatprep.subr.mxu0 0.0
        %387 = vmatpush1.msra.mxu0 0.0
        %388 = vmatprep.subr.mxu0 0.0
        %389 = vmatpush1.msra.mxu0 0.0
        %390 = vmatprep.subr.mxu0 0.0
        %391 = vmatpush1.msra.mxu0 0.0
        %392 = vmatprep.subr.mxu0 0.0
        %393 = vmatpush1.msra.mxu0 0.0
        %394 = vmatprep.subr.mxu0 0.0
        %395 = vmatpush1.msra.mxu0 0.0
        %396 = vmatprep.subr.mxu0 0.0
        %397 = vmatpush1.msra.mxu0 0.0
        %398 = vmatprep.subr.mxu0 0.0
        %399 = vmatpush1.msra.mxu0 0.0
        %400 = vmatprep.subr.mxu0 0.0
        %401 = vmatpush1.msra.mxu0 0.0
        %402 = vmatprep.subr.mxu0 0.0
        %403 = vmatpush1.msra.mxu0 0.0
        %404 = vmatprep.subr.mxu0 0.0
        %405 = vmatpush1.msra.mxu0 0.0
        %406 = vmatprep.subr.mxu0 0.0
        %407 = vmatpush1.msra.mxu0 0.0
        %408 = vmatprep.subr.mxu0 0.0
        %409 = vmatpush1.msra.mxu0 0.0
        %410 = vmatprep.subr.mxu0 0.0
        %411 = vmatpush1.msra.mxu0 0.0
        %412 = vmatprep.subr.mxu0 0.0
        %413 = vmatpush1.msra.mxu0 0.0
        %414 = vmatprep.subr.mxu0 0.0
        %415 = vmatpush1.msra.mxu0 0.0
        %416 = vmatprep.subr.mxu0 0.0
        %417 = vmatpush1.msra.mxu0 0.0
        %418 = vmatprep.subr.mxu0 0.0
        %419 = vmatpush1.msra.mxu0 0.0
        %420 = vmatprep.subr.mxu0 0.0
        %421 = vmatpush1.msra.mxu0 0.0
        %422 = vmatprep.subr.mxu0 0.0
        %423 = vmatpush1.msra.mxu0 0.0
        %424 = vmatprep.subr.mxu0 0.0
        %425 = vmatpush1.msra.mxu0 0.0
        %426 = vmatprep.mubr.f32.mxu0 0.0
        %427 = vmatmul.mubr.f32.gmra.mrb[0].mxu0 %v280
        %v428 = vpop.f32.mrb[0].mxu0
        %v429 = vadd.f32 0.0, %v428
        %v430 = vpop.f32.mrb[0].mxu0
        %431 = vmatprep.mubr.f32.mxu0 0.0
        %432 = vmatmul.mubr.f32.gmra.mrb[0].mxu0 %v283
        %v433 = vpop.f32.mrb[0].mxu0
        %v434 = vadd.f32 0.0, %v433
        %v435 = vpop.f32.mrb[0].mxu0
        %436 = vdwg.mxu0
        %v438 = vsel %vm278, %v216, 0
        %v441 = vsel %vm278, %v217, 0
        %443 = vmatprep.subr.mxu0 %v205
        %444 = vmatpush1.msra.mxu0 %v204
        %445 = vmatprep.subr.mxu0 %v208
        %446 = vmatpush1.msra.mxu0 %v207
        %447 = vmatprep.subr.mxu0 %v211
        %448 = vmatpush1.msra.mxu0 %v210
        %449 = vmatprep.subr.mxu0 %v214
        %450 = vmatpush1.msra.mxu0 %v213
        %451 = vmatprep.subr.mxu0 0.0
        %452 = vmatpush1.msra.mxu0 0.0
        %453 = vmatprep.subr.mxu0 0.0
        %454 = vmatpush1.msra.mxu0 0.0
        %455 = vmatprep.subr.mxu0 0.0
        %456 = vmatpush1.msra.mxu0 0.0
        %457 = vmatprep.subr.mxu0 0.0
        %458 = vmatpush1.msra.mxu0 0.0
        %459 = vmatprep.subr.mxu0 0.0
        %460 = vmatpush1.msra.mxu0 0.0
        %461 = vmatprep.subr.mxu0 0.0
        %462 = vmatpush1.msra.mxu0 0.0
        %463 = vmatprep.subr.mxu0 0.0
        %464 = vmatpush1.msra.mxu0 0.0
        %465 = vmatprep.subr.mxu0 0.0
        %466 = vmatpush1.msra.mxu0 0.0
        %467 = vmatprep.subr.mxu0 0.0
        %468 = vmatpush1.msra.mxu0 0.0
        %469 = vmatprep.subr.mxu0 0.0
        %470 = vmatpush1.msra.mxu0 0.0
        %471 = vmatprep.subr.mxu0 0.0
        %472 = vmatpush1.msra.mxu0 0.0
        %473 = vmatprep.subr.mxu0 0.0
        %474 = vmatpush1.msra.mxu0 0.0
        %475 = vmatprep.subr.mxu0 0.0
        %476 = vmatpush1.msra.mxu0 0.0
        %477 = vmatprep.subr.mxu0 0.0
        %478 = vmatpush1.msra.mxu0 0.0
        %479 = vmatprep.subr.mxu0 0.0
        %480 = vmatpush1.msra.mxu0 0.0
        %481 = vmatprep.subr.mxu0 0.0
        %482 = vmatpush1.msra.mxu0 0.0
        %483 = vmatprep.subr.mxu0 0.0
        %484 = vmatpush1.msra.mxu0 0.0
        %485 = vmatprep.subr.mxu0 0.0
        %486 = vmatpush1.msra.mxu0 0.0
        %487 = vmatprep.subr.mxu0 0.0
        %488 = vmatpush1.msra.mxu0 0.0
        %489 = vmatprep.subr.mxu0 0.0
        %490 = vmatpush1.msra.mxu0 0.0
        %491 = vmatprep.subr.mxu0 0.0
        %492 = vmatpush1.msra.mxu0 0.0
        %493 = vmatprep.subr.mxu0 0.0
        %494 = vmatpush1.msra.mxu0 0.0
        %495 = vmatprep.subr.mxu0 0.0
        %496 = vmatpush1.msra.mxu0 0.0
        %497 = vmatprep.subr.mxu0 0.0
        %498 = vmatpush1.msra.mxu0 0.0
        %499 = vmatprep.subr.mxu0 0.0
        %500 = vmatpush1.msra.mxu0 0.0
        %501 = vmatprep.subr.mxu0 0.0
        %502 = vmatpush1.msra.mxu0 0.0
        %503 = vmatprep.subr.mxu0 0.0
        %504 = vmatpush1.msra.mxu0 0.0
        %505 = vmatprep.subr.mxu0 0.0
        %506 = vmatpush1.msra.mxu0 0.0
        %507 = vmatprep.mubr.f32.mxu0 0.0
        %508 = vmatmul.mubr.f32.gmra.mrb[0].mxu0 %v438
        %v509 = vpop.f32.mrb[0].mxu0
        %v510 = vadd.f32 %v352, %v509
        %v511 = vpop.f32.mrb[0].mxu0
        %v512 = vadd.f32 %v354, %v511
        %513 = vmatprep.mubr.f32.mxu0 0.0
        %514 = vmatmul.mubr.f32.gmra.mrb[0].mxu0 %v441
        %v515 = vpop.f32.mrb[0].mxu0
        %v516 = vadd.f32 %v358, %v515
        %v517 = vpop.f32.mrb[0].mxu0
        %v518 = vadd.f32 %v360, %v517
        %519 = vdwg.mxu0
        %520 = vmatprep.subr.mxu0 0.0
        %521 = vmatpush1.msra.mxu0 %v206
        %522 = vmatprep.subr.mxu0 0.0
        %523 = vmatpush1.msra.mxu0 %v209
        %524 = vmatprep.subr.mxu0 0.0
        %525 = vmatpush1.msra.mxu0 %v212
        %526 = vmatprep.subr.mxu0 0.0
        %527 = vmatpush1.msra.mxu0 %v215
        %528 = vmatprep.subr.mxu0 0.0
        %529 = vmatpush1.msra.mxu0 0.0
        %530 = vmatprep.subr.mxu0 0.0
        %531 = vmatpush1.msra.mxu0 0.0
        %532 = vmatprep.subr.mxu0 0.0
        %533 = vmatpush1.msra.mxu0 0.0
        %534 = vmatprep.subr.mxu0 0.0
        %535 = vmatpush1.msra.mxu0 0.0
        %536 = vmatprep.subr.mxu0 0.0
        %537 = vmatpush1.msra.mxu0 0.0
        %538 = vmatprep.subr.mxu0 0.0
        %539 = vmatpush1.msra.mxu0 0.0
        %540 = vmatprep.subr.mxu0 0.0
        %541 = vmatpush1.msra.mxu0 0.0
        %542 = vmatprep.subr.mxu0 0.0
        %543 = vmatpush1.msra.mxu0 0.0
        %544 = vmatprep.subr.mxu0 0.0
        %545 = vmatpush1.msra.mxu0 0.0
        %546 = vmatprep.subr.mxu0 0.0
        %547 = vmatpush1.msra.mxu0 0.0
        %548 = vmatprep.subr.mxu0 0.0
        %549 = vmatpush1.msra.mxu0 0.0
        %550 = vmatprep.subr.mxu0 0.0
        %551 = vmatpush1.msra.mxu0 0.0
        %552 = vmatprep.subr.mxu0 0.0
        %553 = vmatpush1.msra.mxu0 0.0
        %554 = vmatprep.subr.mxu0 0.0
        %555 = vmatpush1.msra.mxu0 0.0
        %556 = vmatprep.subr.mxu0 0.0
        %557 = vmatpush1.msra.mxu0 0.0
        %558 = vmatprep.subr.mxu0 0.0
        %559 = vmatpush1.msra.mxu0 0.0
        %560 = vmatprep.subr.mxu0 0.0
        %561 = vmatpush1.msra.mxu0 0.0
        %562 = vmatprep.subr.mxu0 0.0
        %563 = vmatpush1.msra.mxu0 0.0
        %564 = vmatprep.subr.mxu0 0.0
        %565 = vmatpush1.msra.mxu0 0.0
        %566 = vmatprep.subr.mxu0 0.0
        %567 = vmatpush1.msra.mxu0 0.0
        %568 = vmatprep.subr.mxu0 0.0
        %569 = vmatpush1.msra.mxu0 0.0
        %570 = vmatprep.subr.mxu0 0.0
        %571 = vmatpush1.msra.mxu0 0.0
        %572 = vmatprep.subr.mxu0 0.0
        %573 = vmatpush1.msra.mxu0 0.0
        %574 = vmatprep.subr.mxu0 0.0
        %575 = vmatpush1.msra.mxu0 0.0
        %576 = vmatprep.subr.mxu0 0.0
        %577 = vmatpush1.msra.mxu0 0.0
        %578 = vmatprep.subr.mxu0 0.0
        %579 = vmatpush1.msra.mxu0 0.0
        %580 = vmatprep.subr.mxu0 0.0
        %581 = vmatpush1.msra.mxu0 0.0
        %582 = vmatprep.subr.mxu0 0.0
        %583 = vmatpush1.msra.mxu0 0.0
        %584 = vmatprep.mubr.f32.mxu0 0.0
        %585 = vmatmul.mubr.f32.gmra.mrb[0].mxu0 %v438
        %v586 = vpop.f32.mrb[0].mxu0
        %v587 = vadd.f32 %v429, %v586
        %v588 = vpop.f32.mrb[0].mxu0
        %589 = vmatprep.mubr.f32.mxu0 0.0
        %590 = vmatmul.mubr.f32.gmra.mrb[0].mxu0 %v441
        %v591 = vpop.f32.mrb[0].mxu0
        %v592 = vadd.f32 %v434, %v591
        %v593 = vpop.f32.mrb[0].mxu0
        %594 = vdwg.mxu0
        %s595 = scalar_lea.vmem [#allocation5], 32
        %v596 = vld [vmem:[%s595] sm:$0xff]
        %v597 = vld [vmem:[%s595 + $0x8] sm:$0xff]
        %598 = vrot.lane.b32.xlu0 %v204, 126
        %v599 = vpop.permute.xlu0 %598
        %600 = vrot.lane.b32.xlu0 %v205, 126
        %v601 = vpop.permute.xlu0 %600
        %602 = vrot.lane.b32.xlu0 %v206, 126
        %v603 = vpop.permute.xlu0 %602
        %604 = vrot.lane.b32.xlu0 %v207, 126
        %v605 = vpop.permute.xlu0 %604
        %606 = vrot.lane.b32.xlu0 %v208, 126
        %v607 = vpop.permute.xlu0 %606
        %608 = vrot.lane.b32.xlu0 %v209, 126
        %v609 = vpop.permute.xlu0 %608
        %610 = vrot.lane.b32.xlu0 %v210, 126
        %v611 = vpop.permute.xlu0 %610
        %612 = vrot.lane.b32.xlu0 %v211, 126
        %v613 = vpop.permute.xlu0 %612
        %614 = vrot.lane.b32.xlu0 %v212, 126
        %v615 = vpop.permute.xlu0 %614
        %616 = vrot.lane.b32.xlu0 %v213, 126
        %v617 = vpop.permute.xlu0 %616
        %618 = vrot.lane.b32.xlu0 %v214, 126
        %v619 = vpop.permute.xlu0 %618
        %620 = vrot.lane.b32.xlu0 %v215, 126
        %v621 = vpop.permute.xlu0 %620
        %vm622 = vcmask 1031168
        %v623 = vsel %vm622, %v599, %v601
        %v624 = vsel %vm622, %v601, %v603
        %v625 = vsel %vm622, %v605, %v607
        %v626 = vsel %vm622, %v607, %v609
        %v627 = vsel %vm622, %v611, %v613
        %v628 = vsel %vm622, %v613, %v615
        %v629 = vsel %vm622, %v617, %v619
        %v630 = vsel %vm622, %v619, %v621
        %v644 = vsel %vm278, %v596, 0
        %v647 = vsel %vm278, %v597, 0
        %649 = vmatprep.subr.mxu0 %v624
        %650 = vmatpush1.msra.mxu0 %v623
        %651 = vmatprep.subr.mxu0 %v626
        %652 = vmatpush1.msra.mxu0 %v625
        %653 = vmatprep.subr.mxu0 %v628
        %654 = vmatpush1.msra.mxu0 %v627
        %655 = vmatprep.subr.mxu0 %v630
        %656 = vmatpush1.msra.mxu0 %v629
        %657 = vmatprep.subr.mxu0 0.0
        %658 = vmatpush1.msra.mxu0 0.0
        %659 = vmatprep.subr.mxu0 0.0
        %660 = vmatpush1.msra.mxu0 0.0
        %661 = vmatprep.subr.mxu0 0.0
        %662 = vmatpush1.msra.mxu0 0.0
        %663 = vmatprep.subr.mxu0 0.0
        %664 = vmatpush1.msra.mxu0 0.0
        %665 = vmatprep.subr.mxu0 0.0
        %666 = vmatpush1.msra.mxu0 0.0
        %667 = vmatprep.subr.mxu0 0.0
        %668 = vmatpush1.msra.mxu0 0.0
        %669 = vmatprep.subr.mxu0 0.0
        %670 = vmatpush1.msra.mxu0 0.0
        %671 = vmatprep.subr.mxu0 0.0
        %672 = vmatpush1.msra.mxu0 0.0
        %673 = vmatprep.subr.mxu0 0.0
        %674 = vmatpush1.msra.mxu0 0.0
        %675 = vmatprep.subr.mxu0 0.0
        %676 = vmatpush1.msra.mxu0 0.0
        %677 = vmatprep.subr.mxu0 0.0
        %678 = vmatpush1.msra.mxu0 0.0
        %679 = vmatprep.subr.mxu0 0.0
        %680 = vmatpush1.msra.mxu0 0.0
        %681 = vmatprep.subr.mxu0 0.0
        %682 = vmatpush1.msra.mxu0 0.0
        %683 = vmatprep.subr.mxu0 0.0
        %684 = vmatpush1.msra.mxu0 0.0
        %685 = vmatprep.subr.mxu0 0.0
        %686 = vmatpush1.msra.mxu0 0.0
        %687 = vmatprep.subr.mxu0 0.0
        %688 = vmatpush1.msra.mxu0 0.0
        %689 = vmatprep.subr.mxu0 0.0
        %690 = vmatpush1.msra.mxu0 0.0
        %691 = vmatprep.subr.mxu0 0.0
        %692 = vmatpush1.msra.mxu0 0.0
        %693 = vmatprep.subr.mxu0 0.0
        %694 = vmatpush1.msra.mxu0 0.0
        %695 = vmatprep.subr.mxu0 0.0
        %696 = vmatpush1.msra.mxu0 0.0
        %697 = vmatprep.subr.mxu0 0.0
        %698 = vmatpush1.msra.mxu0 0.0
        %699 = vmatprep.subr.mxu0 0.0
        %700 = vmatpush1.msra.mxu0 0.0
        %701 = vmatprep.subr.mxu0 0.0
        %702 = vmatpush1.msra.mxu0 0.0
        %703 = vmatprep.subr.mxu0 0.0
        %704 = vmatpush1.msra.mxu0 0.0
        %705 = vmatprep.subr.mxu0 0.0
        %706 = vmatpush1.msra.mxu0 0.0
        %707 = vmatprep.subr.mxu0 0.0
        %708 = vmatpush1.msra.mxu0 0.0
        %709 = vmatprep.subr.mxu0 0.0
        %710 = vmatpush1.msra.mxu0 0.0
        %711 = vmatprep.subr.mxu0 0.0
        %712 = vmatpush1.msra.mxu0 0.0
        %713 = vmatprep.mubr.f32.mxu0 0.0
        %714 = vmatmul.mubr.f32.gmra.mrb[0].mxu0 %v644
        %v715 = vpop.f32.mrb[0].mxu0
        %v716 = vadd.f32 0.0, %v715
        %v717 = vpop.f32.mrb[0].mxu0
        %v718 = vadd.f32 0.0, %v717
        %719 = vmatprep.mubr.f32.mxu0 0.0
        %720 = vmatmul.mubr.f32.gmra.mrb[0].mxu0 %v647
        %v721 = vpop.f32.mrb[0].mxu0
        %v722 = vadd.f32 0.0, %v721
        %v723 = vpop.f32.mrb[0].mxu0
        %v724 = vadd.f32 0.0, %v723
        %725 = vdwg.mxu0
        %726 = vmatprep.subr.mxu0 0.0
        %727 = vmatpush1.msra.mxu0 %v603
        %728 = vmatprep.subr.mxu0 0.0
        %729 = vmatpush1.msra.mxu0 %v609
        %730 = vmatprep.subr.mxu0 0.0
        %731 = vmatpush1.msra.mxu0 %v615
        %732 = vmatprep.subr.mxu0 0.0
        %733 = vmatpush1.msra.mxu0 %v621
        %734 = vmatprep.subr.mxu0 0.0
        %735 = vmatpush1.msra.mxu0 0.0
        %736 = vmatprep.subr.mxu0 0.0
        %737 = vmatpush1.msra.mxu0 0.0
        %738 = vmatprep.subr.mxu0 0.0
        %739 = vmatpush1.msra.mxu0 0.0
        %740 = vmatprep.subr.mxu0 0.0
        %741 = vmatpush1.msra.mxu0 0.0
        %742 = vmatprep.subr.mxu0 0.0
        %743 = vmatpush1.msra.mxu0 0.0
        %744 = vmatprep.subr.mxu0 0.0
        %745 = vmatpush1.msra.mxu0 0.0
        %746 = vmatprep.subr.mxu0 0.0
        %747 = vmatpush1.msra.mxu0 0.0
        %748 = vmatprep.subr.mxu0 0.0
        %749 = vmatpush1.msra.mxu0 0.0
        %750 = vmatprep.subr.mxu0 0.0
        %751 = vmatpush1.msra.mxu0 0.0
        %752 = vmatprep.subr.mxu0 0.0
        %753 = vmatpush1.msra.mxu0 0.0
        %754 = vmatprep.subr.mxu0 0.0
        %755 = vmatpush1.msra.mxu0 0.0
        %756 = vmatprep.subr.mxu0 0.0
        %757 = vmatpush1.msra.mxu0 0.0
        %758 = vmatprep.subr.mxu0 0.0
        %759 = vmatpush1.msra.mxu0 0.0
        %760 = vmatprep.subr.mxu0 0.0
        %761 = vmatpush1.msra.mxu0 0.0
        %762 = vmatprep.subr.mxu0 0.0
        %763 = vmatpush1.msra.mxu0 0.0
        %764 = vmatprep.subr.mxu0 0.0
        %765 = vmatpush1.msra.mxu0 0.0
        %766 = vmatprep.subr.mxu0 0.0
        %767 = vmatpush1.msra.mxu0 0.0
        %768 = vmatprep.subr.mxu0 0.0
        %769 = vmatpush1.msra.mxu0 0.0
        %770 = vmatprep.subr.mxu0 0.0
        %771 = vmatpush1.msra.mxu0 0.0
        %772 = vmatprep.subr.mxu0 0.0
        %773 = vmatpush1.msra.mxu0 0.0
        %774 = vmatprep.subr.mxu0 0.0
        %775 = vmatpush1.msra.mxu0 0.0
        %776 = vmatprep.subr.mxu0 0.0
        %777 = vmatpush1.msra.mxu0 0.0
        %778 = vmatprep.subr.mxu0 0.0
        %779 = vmatpush1.msra.mxu0 0.0
        %780 = vmatprep.subr.mxu0 0.0
        %781 = vmatpush1.msra.mxu0 0.0
        %782 = vmatprep.subr.mxu0 0.0
        %783 = vmatpush1.msra.mxu0 0.0
        %784 = vmatprep.subr.mxu0 0.0
        %785 = vmatpush1.msra.mxu0 0.0
        %786 = vmatprep.subr.mxu0 0.0
        %787 = vmatpush1.msra.mxu0 0.0
        %788 = vmatprep.subr.mxu0 0.0
        %789 = vmatpush1.msra.mxu0 0.0
        %790 = vmatprep.mubr.f32.mxu0 0.0
        %791 = vmatmul.mubr.f32.gmra.mrb[0].mxu0 %v644
        %v792 = vpop.f32.mrb[0].mxu0
        %v793 = vadd.f32 0.0, %v792
        %v794 = vpop.f32.mrb[0].mxu0
        %795 = vmatprep.mubr.f32.mxu0 0.0
        %796 = vmatmul.mubr.f32.gmra.mrb[0].mxu0 %v647
        %v797 = vpop.f32.mrb[0].mxu0
        %v798 = vadd.f32 0.0, %v797
        %v799 = vpop.f32.mrb[0].mxu0
        %800 = vdwg.mxu0
        %v801 = vadd.f32 %v510, %v716
        %v802 = vadd.f32 %v512, %v718
        %v803 = vadd.f32 %v587, %v793
        %v804 = vadd.f32 %v516, %v722
        %v805 = vadd.f32 %v518, %v724
        %v806 = vadd.f32 %v592, %v798
        %s807 = scalar_lea.vmem [#allocation5], 48
        %v808 = vld [vmem:[%s807] sm:$0xff]
        %v809 = vld [vmem:[%s807 + $0x8] sm:$0xff]
        %810 = vrot.lane.b32.xlu0 %v204, 110
        %v811 = vpop.permute.xlu0 %810
        %812 = vrot.lane.b32.xlu0 %v205, 110
        %v813 = vpop.permute.xlu0 %812
        %814 = vrot.lane.b32.xlu0 %v206, 110
        %v815 = vpop.permute.xlu0 %814
        %816 = vrot.lane.b32.xlu0 %v207, 110
        %v817 = vpop.permute.xlu0 %816
        %818 = vrot.lane.b32.xlu0 %v208, 110
        %v819 = vpop.permute.xlu0 %818
        %820 = vrot.lane.b32.xlu0 %v209, 110
        %v821 = vpop.permute.xlu0 %820
        %822 = vrot.lane.b32.xlu0 %v210, 110
        %v823 = vpop.permute.xlu0 %822
        %824 = vrot.lane.b32.xlu0 %v211, 110
        %v825 = vpop.permute.xlu0 %824
        %826 = vrot.lane.b32.xlu0 %v212, 110
        %v827 = vpop.permute.xlu0 %826
        %828 = vrot.lane.b32.xlu0 %v213, 110
        %v829 = vpop.permute.xlu0 %828
        %830 = vrot.lane.b32.xlu0 %v214, 110
        %v831 = vpop.permute.xlu0 %830
        %832 = vrot.lane.b32.xlu0 %v215, 110
        %v833 = vpop.permute.xlu0 %832
        %vm834 = vcmask 900096
        %v835 = vsel %vm834, %v811, %v813
        %v836 = vsel %vm834, %v813, %v815
        %v837 = vsel %vm834, %v817, %v819
        %v838 = vsel %vm834, %v819, %v821
        %v839 = vsel %vm834, %v823, %v825
        %v840 = vsel %vm834, %v825, %v827
        %v841 = vsel %vm834, %v829, %v831
        %v842 = vsel %vm834, %v831, %v833
        %v856 = vsel %vm278, %v808, 0
        %v859 = vsel %vm278, %v809, 0
        %861 = vmatprep.subr.mxu0 %v836
        %862 = vmatpush1.msra.mxu0 %v835
        %863 = vmatprep.subr.mxu0 %v838
        %864 = vmatpush1.msra.mxu0 %v837
        %865 = vmatprep.subr.mxu0 %v840
        %866 = vmatpush1.msra.mxu0 %v839
        %867 = vmatprep.subr.mxu0 %v842
        %868 = vmatpush1.msra.mxu0 %v841
        %869 = vmatprep.subr.mxu0 0.0
        %870 = vmatpush1.msra.mxu0 0.0
        %871 = vmatprep.subr.mxu0 0.0
        %872 = vmatpush1.msra.mxu0 0.0
        %873 = vmatprep.subr.mxu0 0.0
        %874 = vmatpush1.msra.mxu0 0.0
        %875 = vmatprep.subr.mxu0 0.0
        %876 = vmatpush1.msra.mxu0 0.0
        %877 = vmatprep.subr.mxu0 0.0
        %878 = vmatpush1.msra.mxu0 0.0
        %879 = vmatprep.subr.mxu0 0.0
        %880 = vmatpush1.msra.mxu0 0.0
        %881 = vmatprep.subr.mxu0 0.0
        %882 = vmatpush1.msra.mxu0 0.0
        %883 = vmatprep.subr.mxu0 0.0
        %884 = vmatpush1.msra.mxu0 0.0
        %885 = vmatprep.subr.mxu0 0.0
        %886 = vmatpush1.msra.mxu0 0.0
        %887 = vmatprep.subr.mxu0 0.0
        %888 = vmatpush1.msra.mxu0 0.0
        %889 = vmatprep.subr.mxu0 0.0
        %890 = vmatpush1.msra.mxu0 0.0
        %891 = vmatprep.subr.mxu0 0.0
        %892 = vmatpush1.msra.mxu0 0.0
        %893 = vmatprep.subr.mxu0 0.0
        %894 = vmatpush1.msra.mxu0 0.0
        %895 = vmatprep.subr.mxu0 0.0
        %896 = vmatpush1.msra.mxu0 0.0
        %897 = vmatprep.subr.mxu0 0.0
        %898 = vmatpush1.msra.mxu0 0.0
        %899 = vmatprep.subr.mxu0 0.0
        %900 = vmatpush1.msra.mxu0 0.0
        %901 = vmatprep.subr.mxu0 0.0
        %902 = vmatpush1.msra.mxu0 0.0
        %903 = vmatprep.subr.mxu0 0.0
        %904 = vmatpush1.msra.mxu0 0.0
        %905 = vmatprep.subr.mxu0 0.0
        %906 = vmatpush1.msra.mxu0 0.0
        %907 = vmatprep.subr.mxu0 0.0
        %908 = vmatpush1.msra.mxu0 0.0
        %909 = vmatprep.subr.mxu0 0.0
        %910 = vmatpush1.msra.mxu0 0.0
        %911 = vmatprep.subr.mxu0 0.0
        %912 = vmatpush1.msra.mxu0 0.0
        %913 = vmatprep.subr.mxu0 0.0
        %914 = vmatpush1.msra.mxu0 0.0
        %915 = vmatprep.subr.mxu0 0.0
        %916 = vmatpush1.msra.mxu0 0.0
        %917 = vmatprep.subr.mxu0 0.0
        %918 = vmatpush1.msra.mxu0 0.0
        %919 = vmatprep.subr.mxu0 0.0
        %920 = vmatpush1.msra.mxu0 0.0
        %921 = vmatprep.subr.mxu0 0.0
        %922 = vmatpush1.msra.mxu0 0.0
        %923 = vmatprep.subr.mxu0 0.0
        %924 = vmatpush1.msra.mxu0 0.0
        %925 = vmatprep.mubr.f32.mxu0 0.0
        %926 = vmatmul.mubr.f32.gmra.mrb[0].mxu0 %v856
        %v927 = vpop.f32.mrb[0].mxu0
        %v928 = vadd.f32 0.0, %v927
        %v929 = vpop.f32.mrb[0].mxu0
        %v930 = vadd.f32 0.0, %v929
        %931 = vmatprep.mubr.f32.mxu0 0.0
        %932 = vmatmul.mubr.f32.gmra.mrb[0].mxu0 %v859
        %v933 = vpop.f32.mrb[0].mxu0
        %v934 = vadd.f32 0.0, %v933
        %v935 = vpop.f32.mrb[0].mxu0
        %v936 = vadd.f32 0.0, %v935
        %937 = vdwg.mxu0
        %938 = vmatprep.subr.mxu0 0.0
        %939 = vmatpush1.msra.mxu0 %v815
        %940 = vmatprep.subr.mxu0 0.0
        %941 = vmatpush1.msra.mxu0 %v821
        %942 = vmatprep.subr.mxu0 0.0
        %943 = vmatpush1.msra.mxu0 %v827
        %944 = vmatprep.subr.mxu0 0.0
        %945 = vmatpush1.msra.mxu0 %v833
        %946 = vmatprep.subr.mxu0 0.0
        %947 = vmatpush1.msra.mxu0 0.0
        %948 = vmatprep.subr.mxu0 0.0
        %949 = vmatpush1.msra.mxu0 0.0
        %950 = vmatprep.subr.mxu0 0.0
        %951 = vmatpush1.msra.mxu0 0.0
        %952 = vmatprep.subr.mxu0 0.0
        %953 = vmatpush1.msra.mxu0 0.0
        %954 = vmatprep.subr.mxu0 0.0
        %955 = vmatpush1.msra.mxu0 0.0
        %956 = vmatprep.subr.mxu0 0.0
        %957 = vmatpush1.msra.mxu0 0.0
        %958 = vmatprep.subr.mxu0 0.0
        %959 = vmatpush1.msra.mxu0 0.0
        %960 = vmatprep.subr.mxu0 0.0
        %961 = vmatpush1.msra.mxu0 0.0
        %962 = vmatprep.subr.mxu0 0.0
        %963 = vmatpush1.msra.mxu0 0.0
        %964 = vmatprep.subr.mxu0 0.0
        %965 = vmatpush1.msra.mxu0 0.0
        %966 = vmatprep.subr.mxu0 0.0
        %967 = vmatpush1.msra.mxu0 0.0
        %968 = vmatprep.subr.mxu0 0.0
        %969 = vmatpush1.msra.mxu0 0.0
        %970 = vmatprep.subr.mxu0 0.0
        %971 = vmatpush1.msra.mxu0 0.0
        %972 = vmatprep.subr.mxu0 0.0
        %973 = vmatpush1.msra.mxu0 0.0
        %974 = vmatprep.subr.mxu0 0.0
        %975 = vmatpush1.msra.mxu0 0.0
        %976 = vmatprep.subr.mxu0 0.0
        %977 = vmatpush1.msra.mxu0 0.0
        %978 = vmatprep.subr.mxu0 0.0
        %979 = vmatpush1.msra.mxu0 0.0
        %980 = vmatprep.subr.mxu0 0.0
        %981 = vmatpush1.msra.mxu0 0.0
        %982 = vmatprep.subr.mxu0 0.0
        %983 = vmatpush1.msra.mxu0 0.0
        %984 = vmatprep.subr.mxu0 0.0
        %985 = vmatpush1.msra.mxu0 0.0
        %986 = vmatprep.subr.mxu0 0.0
        %987 = vmatpush1.msra.mxu0 0.0
        %988 = vmatprep.subr.mxu0 0.0
        %989 = vmatpush1.msra.mxu0 0.0
        %990 = vmatprep.subr.mxu0 0.0
        %991 = vmatpush1.msra.mxu0 0.0
        %992 = vmatprep.subr.mxu0 0.0
        %993 = vmatpush1.msra.mxu0 0.0
        %994 = vmatprep.subr.mxu0 0.0
        %995 = vmatpush1.msra.mxu0 0.0
        %996 = vmatprep.subr.mxu0 0.0
        %997 = vmatpush1.msra.mxu0 0.0
        %998 = vmatprep.subr.mxu0 0.0
        %999 = vmatpush1.msra.mxu0 0.0
        %1000 = vmatprep.subr.mxu0 0.0
        %1001 = vmatpush1.msra.mxu0 0.0
        %1002 = vmatprep.mubr.f32.mxu0 0.0
        %1003 = vmatmul.mubr.f32.gmra.mrb[0].mxu0 %v856
        %v1004 = vpop.f32.mrb[0].mxu0
        %v1005 = vadd.f32 0.0, %v1004
        %v1006 = vpop.f32.mrb[0].mxu0
        %1007 = vmatprep.mubr.f32.mxu0 0.0
        %1008 = vmatmul.mubr.f32.gmra.mrb[0].mxu0 %v859
        %v1009 = vpop.f32.mrb[0].mxu0
        %v1010 = vadd.f32 0.0, %v1009
        %v1011 = vpop.f32.mrb[0].mxu0
        %1012 = vdwg.mxu0
        %v1013 = vadd.f32 %v801, %v928
        %v1014 = vadd.f32 %v802, %v930
        %v1015 = vadd.f32 %v803, %v1005
        %v1016 = vadd.f32 %v804, %v934
        %v1017 = vadd.f32 %v805, %v936
        %v1018 = vadd.f32 %v806, %v1010
        %s1019 = scalar_lea.vmem [#allocation5], 64
        %v1020 = vld [vmem:[%s1019] sm:$0xff]
        %v1021 = vld [vmem:[%s1019 + $0x8] sm:$0xff]
        %1022 = vrot.lane.b32.xlu0 %v204, 109
        %v1023 = vpop.permute.xlu0 %1022
        %1024 = vrot.lane.b32.xlu0 %v205, 109
        %v1025 = vpop.permute.xlu0 %1024
        %1026 = vrot.lane.b32.xlu0 %v206, 109
        %v1027 = vpop.permute.xlu0 %1026
        %1028 = vrot.lane.b32.xlu0 %v207, 109
        %v1029 = vpop.permute.xlu0 %1028
        %1030 = vrot.lane.b32.xlu0 %v208, 109
        %v1031 = vpop.permute.xlu0 %1030
        %1032 = vrot.lane.b32.xlu0 %v209, 109
        %v1033 = vpop.permute.xlu0 %1032
        %1034 = vrot.lane.b32.xlu0 %v210, 109
        %v1035 = vpop.permute.xlu0 %1034
        %1036 = vrot.lane.b32.xlu0 %v211, 109
        %v1037 = vpop.permute.xlu0 %1036
        %1038 = vrot.lane.b32.xlu0 %v212, 109
        %v1039 = vpop.permute.xlu0 %1038
        %1040 = vrot.lane.b32.xlu0 %v213, 109
        %v1041 = vpop.permute.xlu0 %1040
        %1042 = vrot.lane.b32.xlu0 %v214, 109
        %v1043 = vpop.permute.xlu0 %1042
        %1044 = vrot.lane.b32.xlu0 %v215, 109
        %v1045 = vpop.permute.xlu0 %1044
        %vm1046 = vcmask 891904
        %v1047 = vsel %vm1046, %v1023, %v1025
        %v1048 = vsel %vm1046, %v1025, %v1027
        %v1049 = vsel %vm1046, %v1029, %v1031
        %v1050 = vsel %vm1046, %v1031, %v1033
        %v1051 = vsel %vm1046, %v1035, %v1037
        %v1052 = vsel %vm1046, %v1037, %v1039
        %v1053 = vsel %vm1046, %v1041, %v1043
        %v1054 = vsel %vm1046, %v1043, %v1045
        %v1068 = vsel %vm278, %v1020, 0
        %v1071 = vsel %vm278, %v1021, 0
        %1073 = vmatprep.subr.mxu0 %v1048
        %1074 = vmatpush1.msra.mxu0 %v1047
        %1075 = vmatprep.subr.mxu0 %v1050
        %1076 = vmatpush1.msra.mxu0 %v1049
        %1077 = vmatprep.subr.mxu0 %v1052
        %1078 = vmatpush1.msra.mxu0 %v1051
        %1079 = vmatprep.subr.mxu0 %v1054
        %1080 = vmatpush1.msra.mxu0 %v1053
        %1081 = vmatprep.subr.mxu0 0.0
        %1082 = vmatpush1.msra.mxu0 0.0
        %1083 = vmatprep.subr.mxu0 0.0
        %1084 = vmatpush1.msra.mxu0 0.0
        %1085 = vmatprep.subr.mxu0 0.0
        %1086 = vmatpush1.msra.mxu0 0.0
        %1087 = vmatprep.subr.mxu0 0.0
        %1088 = vmatpush1.msra.mxu0 0.0
        %1089 = vmatprep.subr.mxu0 0.0
        %1090 = vmatpush1.msra.mxu0 0.0
        %1091 = vmatprep.subr.mxu0 0.0
        %1092 = vmatpush1.msra.mxu0 0.0
        %1093 = vmatprep.subr.mxu0 0.0
        %1094 = vmatpush1.msra.mxu0 0.0
        %1095 = vmatprep.subr.mxu0 0.0
        %1096 = vmatpush1.msra.mxu0 0.0
        %1097 = vmatprep.subr.mxu0 0.0
        %1098 = vmatpush1.msra.mxu0 0.0
        %1099 = vmatprep.subr.mxu0 0.0
        %1100 = vmatpush1.msra.mxu0 0.0
        %1101 = vmatprep.subr.mxu0 0.0
        %1102 = vmatpush1.msra.mxu0 0.0
        %1103 = vmatprep.subr.mxu0 0.0
        %1104 = vmatpush1.msra.mxu0 0.0
        %1105 = vmatprep.subr.mxu0 0.0
        %1106 = vmatpush1.msra.mxu0 0.0
        %1107 = vmatprep.subr.mxu0 0.0
        %1108 = vmatpush1.msra.mxu0 0.0
        %1109 = vmatprep.subr.mxu0 0.0
        %1110 = vmatpush1.msra.mxu0 0.0
        %1111 = vmatprep.subr.mxu0 0.0
        %1112 = vmatpush1.msra.mxu0 0.0
        %1113 = vmatprep.subr.mxu0 0.0
        %1114 = vmatpush1.msra.mxu0 0.0
        %1115 = vmatprep.subr.mxu0 0.0
        %1116 = vmatpush1.msra.mxu0 0.0
        %1117 = vmatprep.subr.mxu0 0.0
        %1118 = vmatpush1.msra.mxu0 0.0
        %1119 = vmatprep.subr.mxu0 0.0
        %1120 = vmatpush1.msra.mxu0 0.0
        %1121 = vmatprep.subr.mxu0 0.0
        %1122 = vmatpush1.msra.mxu0 0.0
        %1123 = vmatprep.subr.mxu0 0.0
        %1124 = vmatpush1.msra.mxu0 0.0
        %1125 = vmatprep.subr.mxu0 0.0
        %1126 = vmatpush1.msra.mxu0 0.0
        %1127 = vmatprep.subr.mxu0 0.0
        %1128 = vmatpush1.msra.mxu0 0.0
        %1129 = vmatprep.subr.mxu0 0.0
        %1130 = vmatpush1.msra.mxu0 0.0
        %1131 = vmatprep.subr.mxu0 0.0
        %1132 = vmatpush1.msra.mxu0 0.0
        %1133 = vmatprep.subr.mxu0 0.0
        %1134 = vmatpush1.msra.mxu0 0.0
        %1135 = vmatprep.subr.mxu0 0.0
        %1136 = vmatpush1.msra.mxu0 0.0
        %1137 = vmatprep.mubr.f32.mxu0 0.0
        %1138 = vmatmul.mubr.f32.gmra.mrb[0].mxu0 %v1068
        %v1139 = vpop.f32.mrb[0].mxu0
        %v1140 = vadd.f32 0.0, %v1139
        %v1141 = vpop.f32.mrb[0].mxu0
        %v1142 = vadd.f32 0.0, %v1141
        %1143 = vmatprep.mubr.f32.mxu0 0.0
        %1144 = vmatmul.mubr.f32.gmra.mrb[0].mxu0 %v1071
        %v1145 = vpop.f32.mrb[0].mxu0
        %v1146 = vadd.f32 0.0, %v1145
        %v1147 = vpop.f32.mrb[0].mxu0
        %v1148 = vadd.f32 0.0, %v1147
        %1149 = vdwg.mxu0
        %1150 = vmatprep.subr.mxu0 0.0
        %1151 = vmatpush1.msra.mxu0 %v1027
        %1152 = vmatprep.subr.mxu0 0.0
        %1153 = vmatpush1.msra.mxu0 %v1033
        %1154 = vmatprep.subr.mxu0 0.0
        %1155 = vmatpush1.msra.mxu0 %v1039
        %1156 = vmatprep.subr.mxu0 0.0
        %1157 = vmatpush1.msra.mxu0 %v1045
        %1158 = vmatprep.subr.mxu0 0.0
        %1159 = vmatpush1.msra.mxu0 0.0
        %1160 = vmatprep.subr.mxu0 0.0
        %1161 = vmatpush1.msra.mxu0 0.0
        %1162 = vmatprep.subr.mxu0 0.0
        %1163 = vmatpush1.msra.mxu0 0.0
        %1164 = vmatprep.subr.mxu0 0.0
        %1165 = vmatpush1.msra.mxu0 0.0
        %1166 = vmatprep.subr.mxu0 0.0
        %1167 = vmatpush1.msra.mxu0 0.0
        %1168 = vmatprep.subr.mxu0 0.0
        %1169 = vmatpush1.msra.mxu0 0.0
        %1170 = vmatprep.subr.mxu0 0.0
        %1171 = vmatpush1.msra.mxu0 0.0
        %1172 = vmatprep.subr.mxu0 0.0
        %1173 = vmatpush1.msra.mxu0 0.0
        %1174 = vmatprep.subr.mxu0 0.0
        %1175 = vmatpush1.msra.mxu0 0.0
        %1176 = vmatprep.subr.mxu0 0.0
        %1177 = vmatpush1.msra.mxu0 0.0
        %1178 = vmatprep.subr.mxu0 0.0
        %1179 = vmatpush1.msra.mxu0 0.0
        %1180 = vmatprep.subr.mxu0 0.0
        %1181 = vmatpush1.msra.mxu0 0.0
        %1182 = vmatprep.subr.mxu0 0.0
        %1183 = vmatpush1.msra.mxu0 0.0
        %1184 = vmatprep.subr.mxu0 0.0
        %1185 = vmatpush1.msra.mxu0 0.0
        %1186 = vmatprep.subr.mxu0 0.0
        %1187 = vmatpush1.msra.mxu0 0.0
        %1188 = vmatprep.subr.mxu0 0.0
        %1189 = vmatpush1.msra.mxu0 0.0
        %1190 = vmatprep.subr.mxu0 0.0
        %1191 = vmatpush1.msra.mxu0 0.0
        %1192 = vmatprep.subr.mxu0 0.0
        %1193 = vmatpush1.msra.mxu0 0.0
        %1194 = vmatprep.subr.mxu0 0.0
        %1195 = vmatpush1.msra.mxu0 0.0
        %1196 = vmatprep.subr.mxu0 0.0
        %1197 = vmatpush1.msra.mxu0 0.0
        %1198 = vmatprep.subr.mxu0 0.0
        %1199 = vmatpush1.msra.mxu0 0.0
        %1200 = vmatprep.subr.mxu0 0.0
        %1201 = vmatpush1.msra.mxu0 0.0
        %1202 = vmatprep.subr.mxu0 0.0
        %1203 = vmatpush1.msra.mxu0 0.0
        %1204 = vmatprep.subr.mxu0 0.0
        %1205 = vmatpush1.msra.mxu0 0.0
        %1206 = vmatprep.subr.mxu0 0.0
        %1207 = vmatpush1.msra.mxu0 0.0
        %1208 = vmatprep.subr.mxu0 0.0
        %1209 = vmatpush1.msra.mxu0 0.0
        %1210 = vmatprep.subr.mxu0 0.0
        %1211 = vmatpush1.msra.mxu0 0.0
        %1212 = vmatprep.subr.mxu0 0.0
        %1213 = vmatpush1.msra.mxu0 0.0
        %1214 = vmatprep.mubr.f32.mxu0 0.0
        %1215 = vmatmul.mubr.f32.gmra.mrb[0].mxu0 %v1068
        %v1216 = vpop.f32.mrb[0].mxu0
        %v1217 = vadd.f32 0.0, %v1216
        %v1218 = vpop.f32.mrb[0].mxu0
        %1219 = vmatprep.mubr.f32.mxu0 0.0
        %1220 = vmatmul.mubr.f32.gmra.mrb[0].mxu0 %v1071
        %v1221 = vpop.f32.mrb[0].mxu0
        %v1222 = vadd.f32 0.0, %v1221
        %v1223 = vpop.f32.mrb[0].mxu0
        %1224 = vdwg.mxu0
        %v1225 = vadd.f32 %v1013, %v1140
        %v1226 = vadd.f32 %v1014, %v1142
        %v1227 = vadd.f32 %v1015, %v1217
        %v1228 = vadd.f32 %v1016, %v1146
        %v1229 = vadd.f32 %v1017, %v1148
        %v1230 = vadd.f32 %v1018, %v1222
        %s1231 = scalar_lea.vmem [#allocation5], 80
        %v1232 = vld [vmem:[%s1231] sm:$0xff]
        %v1233 = vld [vmem:[%s1231 + $0x8] sm:$0xff]
        %1234 = vrot.lane.b32.xlu0 %v204, 108
        %v1235 = vpop.permute.xlu0 %1234
        %1236 = vrot.lane.b32.xlu0 %v205, 108
        %v1237 = vpop.permute.xlu0 %1236
        %1238 = vrot.lane.b32.xlu0 %v206, 108
        %v1239 = vpop.permute.xlu0 %1238
        %1240 = vrot.lane.b32.xlu0 %v207, 108
        %v1241 = vpop.permute.xlu0 %1240
        %1242 = vrot.lane.b32.xlu0 %v208, 108
        %v1243 = vpop.permute.xlu0 %1242
        %1244 = vrot.lane.b32.xlu0 %v209, 108
        %v1245 = vpop.permute.xlu0 %1244
        %1246 = vrot.lane.b32.xlu0 %v210, 108
        %v1247 = vpop.permute.xlu0 %1246
        %1248 = vrot.lane.b32.xlu0 %v211, 108
        %v1249 = vpop.permute.xlu0 %1248
        %1250 = vrot.lane.b32.xlu0 %v212, 108
        %v1251 = vpop.permute.xlu0 %1250
        %1252 = vrot.lane.b32.xlu0 %v213, 108
        %v1253 = vpop.permute.xlu0 %1252
        %1254 = vrot.lane.b32.xlu0 %v214, 108
        %v1255 = vpop.permute.xlu0 %1254
        %1256 = vrot.lane.b32.xlu0 %v215, 108
        %v1257 = vpop.permute.xlu0 %1256
        %vm1258 = vcmask 883712
        %v1259 = vsel %vm1258, %v1235, %v1237
        %v1260 = vsel %vm1258, %v1237, %v1239
        %v1261 = vsel %vm1258, %v1241, %v1243
        %v1262 = vsel %vm1258, %v1243, %v1245
        %v1263 = vsel %vm1258, %v1247, %v1249
        %v1264 = vsel %vm1258, %v1249, %v1251
        %v1265 = vsel %vm1258, %v1253, %v1255
        %v1266 = vsel %vm1258, %v1255, %v1257
        %v1280 = vsel %vm278, %v1232, 0
        %v1283 = vsel %vm278, %v1233, 0
        %1285 = vmatprep.subr.mxu0 %v1260
        %1286 = vmatpush1.msra.mxu0 %v1259
        %1287 = vmatprep.subr.mxu0 %v1262
        %1288 = vmatpush1.msra.mxu0 %v1261
        %1289 = vmatprep.subr.mxu0 %v1264
        %1290 = vmatpush1.msra.mxu0 %v1263
        %1291 = vmatprep.subr.mxu0 %v1266
        %1292 = vmatpush1.msra.mxu0 %v1265
        %1293 = vmatprep.subr.mxu0 0.0
        %1294 = vmatpush1.msra.mxu0 0.0
        %1295 = vmatprep.subr.mxu0 0.0
        %1296 = vmatpush1.msra.mxu0 0.0
        %1297 = vmatprep.subr.mxu0 0.0
        %1298 = vmatpush1.msra.mxu0 0.0
        %1299 = vmatprep.subr.mxu0 0.0
        %1300 = vmatpush1.msra.mxu0 0.0
        %1301 = vmatprep.subr.mxu0 0.0
        %1302 = vmatpush1.msra.mxu0 0.0
        %1303 = vmatprep.subr.mxu0 0.0
        %1304 = vmatpush1.msra.mxu0 0.0
        %1305 = vmatprep.subr.mxu0 0.0
        %1306 = vmatpush1.msra.mxu0 0.0
        %1307 = vmatprep.subr.mxu0 0.0
        %1308 = vmatpush1.msra.mxu0 0.0
        %1309 = vmatprep.subr.mxu0 0.0
        %1310 = vmatpush1.msra.mxu0 0.0
        %1311 = vmatprep.subr.mxu0 0.0
        %1312 = vmatpush1.msra.mxu0 0.0
        %1313 = vmatprep.subr.mxu0 0.0
        %1314 = vmatpush1.msra.mxu0 0.0
        %1315 = vmatprep.subr.mxu0 0.0
        %1316 = vmatpush1.msra.mxu0 0.0
        %1317 = vmatprep.subr.mxu0 0.0
        %1318 = vmatpush1.msra.mxu0 0.0
        %1319 = vmatprep.subr.mxu0 0.0
        %1320 = vmatpush1.msra.mxu0 0.0
        %1321 = vmatprep.subr.mxu0 0.0
        %1322 = vmatpush1.msra.mxu0 0.0
        %1323 = vmatprep.subr.mxu0 0.0
        %1324 = vmatpush1.msra.mxu0 0.0
        %1325 = vmatprep.subr.mxu0 0.0
        %1326 = vmatpush1.msra.mxu0 0.0
        %1327 = vmatprep.subr.mxu0 0.0
        %1328 = vmatpush1.msra.mxu0 0.0
        %1329 = vmatprep.subr.mxu0 0.0
        %1330 = vmatpush1.msra.mxu0 0.0
        %1331 = vmatprep.subr.mxu0 0.0
        %1332 = vmatpush1.msra.mxu0 0.0
        %1333 = vmatprep.subr.mxu0 0.0
        %1334 = vmatpush1.msra.mxu0 0.0
        %1335 = vmatprep.subr.mxu0 0.0
        %1336 = vmatpush1.msra.mxu0 0.0
        %1337 = vmatprep.subr.mxu0 0.0
        %1338 = vmatpush1.msra.mxu0 0.0
        %1339 = vmatprep.subr.mxu0 0.0
        %1340 = vmatpush1.msra.mxu0 0.0
        %1341 = vmatprep.subr.mxu0 0.0
        %1342 = vmatpush1.msra.mxu0 0.0
        %1343 = vmatprep.subr.mxu0 0.0
        %1344 = vmatpush1.msra.mxu0 0.0
        %1345 = vmatprep.subr.mxu0 0.0
        %1346 = vmatpush1.msra.mxu0 0.0
        %1347 = vmatprep.subr.mxu0 0.0
        %1348 = vmatpush1.msra.mxu0 0.0
        %1349 = vmatprep.mubr.f32.mxu0 0.0
        %1350 = vmatmul.mubr.f32.gmra.mrb[0].mxu0 %v1280
        %v1351 = vpop.f32.mrb[0].mxu0
        %v1352 = vadd.f32 0.0, %v1351
        %v1353 = vpop.f32.mrb[0].mxu0
        %v1354 = vadd.f32 0.0, %v1353
        %1355 = vmatprep.mubr.f32.mxu0 0.0
        %1356 = vmatmul.mubr.f32.gmra.mrb[0].mxu0 %v1283
        %v1357 = vpop.f32.mrb[0].mxu0
        %v1358 = vadd.f32 0.0, %v1357
        %v1359 = vpop.f32.mrb[0].mxu0
        %v1360 = vadd.f32 0.0, %v1359
        %1361 = vdwg.mxu0
        %1362 = vmatprep.subr.mxu0 0.0
        %1363 = vmatpush1.msra.mxu0 %v1239
        %1364 = vmatprep.subr.mxu0 0.0
        %1365 = vmatpush1.msra.mxu0 %v1245
        %1366 = vmatprep.subr.mxu0 0.0
        %1367 = vmatpush1.msra.mxu0 %v1251
        %1368 = vmatprep.subr.mxu0 0.0
        %1369 = vmatpush1.msra.mxu0 %v1257
        %1370 = vmatprep.subr.mxu0 0.0
        %1371 = vmatpush1.msra.mxu0 0.0
        %1372 = vmatprep.subr.mxu0 0.0
        %1373 = vmatpush1.msra.mxu0 0.0
        %1374 = vmatprep.subr.mxu0 0.0
        %1375 = vmatpush1.msra.mxu0 0.0
        %1376 = vmatprep.subr.mxu0 0.0
        %1377 = vmatpush1.msra.mxu0 0.0
        %1378 = vmatprep.subr.mxu0 0.0
        %1379 = vmatpush1.msra.mxu0 0.0
        %1380 = vmatprep.subr.mxu0 0.0
        %1381 = vmatpush1.msra.mxu0 0.0
        %1382 = vmatprep.subr.mxu0 0.0
        %1383 = vmatpush1.msra.mxu0 0.0
        %1384 = vmatprep.subr.mxu0 0.0
        %1385 = vmatpush1.msra.mxu0 0.0
        %1386 = vmatprep.subr.mxu0 0.0
        %1387 = vmatpush1.msra.mxu0 0.0
        %1388 = vmatprep.subr.mxu0 0.0
        %1389 = vmatpush1.msra.mxu0 0.0
        %1390 = vmatprep.subr.mxu0 0.0
        %1391 = vmatpush1.msra.mxu0 0.0
        %1392 = vmatprep.subr.mxu0 0.0
        %1393 = vmatpush1.msra.mxu0 0.0
        %1394 = vmatprep.subr.mxu0 0.0
        %1395 = vmatpush1.msra.mxu0 0.0
        %1396 = vmatprep.subr.mxu0 0.0
        %1397 = vmatpush1.msra.mxu0 0.0
        %1398 = vmatprep.subr.mxu0 0.0
        %1399 = vmatpush1.msra.mxu0 0.0
        %1400 = vmatprep.subr.mxu0 0.0
        %1401 = vmatpush1.msra.mxu0 0.0
        %1402 = vmatprep.subr.mxu0 0.0
        %1403 = vmatpush1.msra.mxu0 0.0
        %1404 = vmatprep.subr.mxu0 0.0
        %1405 = vmatpush1.msra.mxu0 0.0
        %1406 = vmatprep.subr.mxu0 0.0
        %1407 = vmatpush1.msra.mxu0 0.0
        %1408 = vmatprep.subr.mxu0 0.0
        %1409 = vmatpush1.msra.mxu0 0.0
        %1410 = vmatprep.subr.mxu0 0.0
        %1411 = vmatpush1.msra.mxu0 0.0
        %1412 = vmatprep.subr.mxu0 0.0
        %1413 = vmatpush1.msra.mxu0 0.0
        %1414 = vmatprep.subr.mxu0 0.0
        %1415 = vmatpush1.msra.mxu0 0.0
        %1416 = vmatprep.subr.mxu0 0.0
        %1417 = vmatpush1.msra.mxu0 0.0
        %1418 = vmatprep.subr.mxu0 0.0
        %1419 = vmatpush1.msra.mxu0 0.0
        %1420 = vmatprep.subr.mxu0 0.0
        %1421 = vmatpush1.msra.mxu0 0.0
        %1422 = vmatprep.subr.mxu0 0.0
        %1423 = vmatpush1.msra.mxu0 0.0
        %1424 = vmatprep.subr.mxu0 0.0
        %1425 = vmatpush1.msra.mxu0 0.0
        %1426 = vmatprep.mubr.f32.mxu0 0.0
        %1427 = vmatmul.mubr.f32.gmra.mrb[0].mxu0 %v1280
        %v1428 = vpop.f32.mrb[0].mxu0
        %v1429 = vadd.f32 0.0, %v1428
        %v1430 = vpop.f32.mrb[0].mxu0
        %1431 = vmatprep.mubr.f32.mxu0 0.0
        %1432 = vmatmul.mubr.f32.gmra.mrb[0].mxu0 %v1283
        %v1433 = vpop.f32.mrb[0].mxu0
        %v1434 = vadd.f32 0.0, %v1433
        %v1435 = vpop.f32.mrb[0].mxu0
        %1436 = vdwg.mxu0
        %v1437 = vadd.f32 %v1225, %v1352
        %v1438 = vadd.f32 %v1226, %v1354
        %v1439 = vadd.f32 %v1227, %v1429
        %v1440 = vadd.f32 %v1228, %v1358
        %v1441 = vadd.f32 %v1229, %v1360
        %v1442 = vadd.f32 %v1230, %v1434
        %s1443 = scalar_lea.vmem [#allocation5], 96
        %v1444 = vld [vmem:[%s1443] sm:$0xff]
        %v1445 = vld [vmem:[%s1443 + $0x8] sm:$0xff]
        %1446 = vrot.lane.b32.xlu0 %v204, 92
        %v1447 = vpop.permute.xlu0 %1446
        %1448 = vrot.lane.b32.xlu0 %v205, 92
        %v1449 = vpop.permute.xlu0 %1448
        %1450 = vrot.lane.b32.xlu0 %v206, 92
        %v1451 = vpop.permute.xlu0 %1450
        %1452 = vrot.lane.b32.xlu0 %v207, 92
        %v1453 = vpop.permute.xlu0 %1452
        %1454 = vrot.lane.b32.xlu0 %v208, 92
        %v1455 = vpop.permute.xlu0 %1454
        %1456 = vrot.lane.b32.xlu0 %v209, 92
        %v1457 = vpop.permute.xlu0 %1456
        %1458 = vrot.lane.b32.xlu0 %v210, 92
        %v1459 = vpop.permute.xlu0 %1458
        %1460 = vrot.lane.b32.xlu0 %v211, 92
        %v1461 = vpop.permute.xlu0 %1460
        %1462 = vrot.lane.b32.xlu0 %v212, 92
        %v1463 = vpop.permute.xlu0 %1462
        %1464 = vrot.lane.b32.xlu0 %v213, 92
        %v1465 = vpop.permute.xlu0 %1464
        %1466 = vrot.lane.b32.xlu0 %v214, 92
        %v1467 = vpop.permute.xlu0 %1466
        %1468 = vrot.lane.b32.xlu0 %v215, 92
        %v1469 = vpop.permute.xlu0 %1468
        %vm1470 = vcmask 752640
        %v1471 = vsel %vm1470, %v1447, %v1449
        %v1472 = vsel %vm1470, %v1449, %v1451
        %v1473 = vsel %vm1470, %v1453, %v1455
        %v1474 = vsel %vm1470, %v1455, %v1457
        %v1475 = vsel %vm1470, %v1459, %v1461
        %v1476 = vsel %vm1470, %v1461, %v1463
        %v1477 = vsel %vm1470, %v1465, %v1467
        %v1478 = vsel %vm1470, %v1467, %v1469
        %v1492 = vsel %vm278, %v1444, 0
        %v1495 = vsel %vm278, %v1445, 0
        %1497 = vmatprep.subr.mxu0 %v1472
        %1498 = vmatpush1.msra.mxu0 %v1471
        %1499 = vmatprep.subr.mxu0 %v1474
        %1500 = vmatpush1.msra.mxu0 %v1473
        %1501 = vmatprep.subr.mxu0 %v1476
        %1502 = vmatpush1.msra.mxu0 %v1475
        %1503 = vmatprep.subr.mxu0 %v1478
        %1504 = vmatpush1.msra.mxu0 %v1477
        %1505 = vmatprep.subr.mxu0 0.0
        %1506 = vmatpush1.msra.mxu0 0.0
        %1507 = vmatprep.subr.mxu0 0.0
        %1508 = vmatpush1.msra.mxu0 0.0
        %1509 = vmatprep.subr.mxu0 0.0
        %1510 = vmatpush1.msra.mxu0 0.0
        %1511 = vmatprep.subr.mxu0 0.0
        %1512 = vmatpush1.msra.mxu0 0.0
        %1513 = vmatprep.subr.mxu0 0.0
        %1514 = vmatpush1.msra.mxu0 0.0
        %1515 = vmatprep.subr.mxu0 0.0
        %1516 = vmatpush1.msra.mxu0 0.0
        %1517 = vmatprep.subr.mxu0 0.0
        %1518 = vmatpush1.msra.mxu0 0.0
        %1519 = vmatprep.subr.mxu0 0.0
        %1520 = vmatpush1.msra.mxu0 0.0
        %1521 = vmatprep.subr.mxu0 0.0
        %1522 = vmatpush1.msra.mxu0 0.0
        %1523 = vmatprep.subr.mxu0 0.0
        %1524 = vmatpush1.msra.mxu0 0.0
        %1525 = vmatprep.subr.mxu0 0.0
        %1526 = vmatpush1.msra.mxu0 0.0
        %1527 = vmatprep.subr.mxu0 0.0
        %1528 = vmatpush1.msra.mxu0 0.0
        %1529 = vmatprep.subr.mxu0 0.0
        %1530 = vmatpush1.msra.mxu0 0.0
        %1531 = vmatprep.subr.mxu0 0.0
        %1532 = vmatpush1.msra.mxu0 0.0
        %1533 = vmatprep.subr.mxu0 0.0
        %1534 = vmatpush1.msra.mxu0 0.0
        %1535 = vmatprep.subr.mxu0 0.0
        %1536 = vmatpush1.msra.mxu0 0.0
        %1537 = vmatprep.subr.mxu0 0.0
        %1538 = vmatpush1.msra.mxu0 0.0
        %1539 = vmatprep.subr.mxu0 0.0
        %1540 = vmatpush1.msra.mxu0 0.0
        %1541 = vmatprep.subr.mxu0 0.0
        %1542 = vmatpush1.msra.mxu0 0.0
        %1543 = vmatprep.subr.mxu0 0.0
        %1544 = vmatpush1.msra.mxu0 0.0
        %1545 = vmatprep.subr.mxu0 0.0
        %1546 = vmatpush1.msra.mxu0 0.0
        %1547 = vmatprep.subr.mxu0 0.0
        %1548 = vmatpush1.msra.mxu0 0.0
        %1549 = vmatprep.subr.mxu0 0.0
        %1550 = vmatpush1.msra.mxu0 0.0
        %1551 = vmatprep.subr.mxu0 0.0
        %1552 = vmatpush1.msra.mxu0 0.0
        %1553 = vmatprep.subr.mxu0 0.0
        %1554 = vmatpush1.msra.mxu0 0.0
        %1555 = vmatprep.subr.mxu0 0.0
        %1556 = vmatpush1.msra.mxu0 0.0
        %1557 = vmatprep.subr.mxu0 0.0
        %1558 = vmatpush1.msra.mxu0 0.0
        %1559 = vmatprep.subr.mxu0 0.0
        %1560 = vmatpush1.msra.mxu0 0.0
        %1561 = vmatprep.mubr.f32.mxu0 0.0
        %1562 = vmatmul.mubr.f32.gmra.mrb[0].mxu0 %v1492
        %v1563 = vpop.f32.mrb[0].mxu0
        %v1564 = vadd.f32 0.0, %v1563
        %v1565 = vpop.f32.mrb[0].mxu0
        %v1566 = vadd.f32 0.0, %v1565
        %1567 = vmatprep.mubr.f32.mxu0 0.0
        %1568 = vmatmul.mubr.f32.gmra.mrb[0].mxu0 %v1495
        %v1569 = vpop.f32.mrb[0].mxu0
        %v1570 = vadd.f32 0.0, %v1569
        %v1571 = vpop.f32.mrb[0].mxu0
        %v1572 = vadd.f32 0.0, %v1571
        %1573 = vdwg.mxu0
        %1574 = vmatprep.subr.mxu0 0.0
        %1575 = vmatpush1.msra.mxu0 %v1451
        %1576 = vmatprep.subr.mxu0 0.0
        %1577 = vmatpush1.msra.mxu0 %v1457
        %1578 = vmatprep.subr.mxu0 0.0
        %1579 = vmatpush1.msra.mxu0 %v1463
        %1580 = vmatprep.subr.mxu0 0.0
        %1581 = vmatpush1.msra.mxu0 %v1469
        %1582 = vmatprep.subr.mxu0 0.0
        %1583 = vmatpush1.msra.mxu0 0.0
        %1584 = vmatprep.subr.mxu0 0.0
        %1585 = vmatpush1.msra.mxu0 0.0
        %1586 = vmatprep.subr.mxu0 0.0
        %1587 = vmatpush1.msra.mxu0 0.0
        %1588 = vmatprep.subr.mxu0 0.0
        %1589 = vmatpush1.msra.mxu0 0.0
        %1590 = vmatprep.subr.mxu0 0.0
        %1591 = vmatpush1.msra.mxu0 0.0
        %1592 = vmatprep.subr.mxu0 0.0
        %1593 = vmatpush1.msra.mxu0 0.0
        %1594 = vmatprep.subr.mxu0 0.0
        %1595 = vmatpush1.msra.mxu0 0.0
        %1596 = vmatprep.subr.mxu0 0.0
        %1597 = vmatpush1.msra.mxu0 0.0
        %1598 = vmatprep.subr.mxu0 0.0
        %1599 = vmatpush1.msra.mxu0 0.0
        %1600 = vmatprep.subr.mxu0 0.0
        %1601 = vmatpush1.msra.mxu0 0.0
        %1602 = vmatprep.subr.mxu0 0.0
        %1603 = vmatpush1.msra.mxu0 0.0
        %1604 = vmatprep.subr.mxu0 0.0
        %1605 = vmatpush1.msra.mxu0 0.0
        %1606 = vmatprep.subr.mxu0 0.0
        %1607 = vmatpush1.msra.mxu0 0.0
        %1608 = vmatprep.subr.mxu0 0.0
        %1609 = vmatpush1.msra.mxu0 0.0
        %1610 = vmatprep.subr.mxu0 0.0
        %1611 = vmatpush1.msra.mxu0 0.0
        %1612 = vmatprep.subr.mxu0 0.0
        %1613 = vmatpush1.msra.mxu0 0.0
        %1614 = vmatprep.subr.mxu0 0.0
        %1615 = vmatpush1.msra.mxu0 0.0
        %1616 = vmatprep.subr.mxu0 0.0
        %1617 = vmatpush1.msra.mxu0 0.0
        %1618 = vmatprep.subr.mxu0 0.0
        %1619 = vmatpush1.msra.mxu0 0.0
        %1620 = vmatprep.subr.mxu0 0.0
        %1621 = vmatpush1.msra.mxu0 0.0
        %1622 = vmatprep.subr.mxu0 0.0
        %1623 = vmatpush1.msra.mxu0 0.0
        %1624 = vmatprep.subr.mxu0 0.0
        %1625 = vmatpush1.msra.mxu0 0.0
        %1626 = vmatprep.subr.mxu0 0.0
        %1627 = vmatpush1.msra.mxu0 0.0
        %1628 = vmatprep.subr.mxu0 0.0
        %1629 = vmatpush1.msra.mxu0 0.0
        %1630 = vmatprep.subr.mxu0 0.0
        %1631 = vmatpush1.msra.mxu0 0.0
        %1632 = vmatprep.subr.mxu0 0.0
        %1633 = vmatpush1.msra.mxu0 0.0
        %1634 = vmatprep.subr.mxu0 0.0
        %1635 = vmatpush1.msra.mxu0 0.0
        %1636 = vmatprep.subr.mxu0 0.0
        %1637 = vmatpush1.msra.mxu0 0.0
        %1638 = vmatprep.mubr.f32.mxu0 0.0
        %1639 = vmatmul.mubr.f32.gmra.mrb[0].mxu0 %v1492
        %v1640 = vpop.f32.mrb[0].mxu0
        %v1641 = vadd.f32 0.0, %v1640
        %v1642 = vpop.f32.mrb[0].mxu0
        %1643 = vmatprep.mubr.f32.mxu0 0.0
        %1644 = vmatmul.mubr.f32.gmra.mrb[0].mxu0 %v1495
        %v1645 = vpop.f32.mrb[0].mxu0
        %v1646 = vadd.f32 0.0, %v1645
        %v1647 = vpop.f32.mrb[0].mxu0
        %1648 = vdwg.mxu0
        %v1649 = vadd.f32 %v1437, %v1564
        %v1650 = vadd.f32 %v1438, %v1566
        %v1651 = vadd.f32 %v1439, %v1641
        %v1652 = vadd.f32 %v1440, %v1570
        %v1653 = vadd.f32 %v1441, %v1572
        %v1654 = vadd.f32 %v1442, %v1646
        %s1655 = scalar_lea.vmem [#allocation5], 112
        %v1656 = vld [vmem:[%s1655] sm:$0xff]
        %v1657 = vld [vmem:[%s1655 + $0x8] sm:$0xff]
        %1658 = vrot.lane.b32.xlu0 %v204, 91
        %v1659 = vpop.permute.xlu0 %1658
        %1660 = vrot.lane.b32.xlu0 %v205, 91
        %v1661 = vpop.permute.xlu0 %1660
        %1662 = vrot.lane.b32.xlu0 %v206, 91
        %v1663 = vpop.permute.xlu0 %1662
        %1664 = vrot.lane.b32.xlu0 %v207, 91
        %v1665 = vpop.permute.xlu0 %1664
        %1666 = vrot.lane.b32.xlu0 %v208, 91
        %v1667 = vpop.permute.xlu0 %1666
        %1668 = vrot.lane.b32.xlu0 %v209, 91
        %v1669 = vpop.permute.xlu0 %1668
        %1670 = vrot.lane.b32.xlu0 %v210, 91
        %v1671 = vpop.permute.xlu0 %1670
        %1672 = vrot.lane.b32.xlu0 %v211, 91
        %v1673 = vpop.permute.xlu0 %1672
        %1674 = vrot.lane.b32.xlu0 %v212, 91
        %v1675 = vpop.permute.xlu0 %1674
        %1676 = vrot.lane.b32.xlu0 %v213, 91
        %v1677 = vpop.permute.xlu0 %1676
        %1678 = vrot.lane.b32.xlu0 %v214, 91
        %v1679 = vpop.permute.xlu0 %1678
        %1680 = vrot.lane.b32.xlu0 %v215, 91
        %v1681 = vpop.permute.xlu0 %1680
        %vm1682 = vcmask 744448
        %v1683 = vsel %vm1682, %v1659, %v1661
        %v1684 = vsel %vm1682, %v1661, %v1663
        %v1685 = vsel %vm1682, %v1665, %v1667
        %v1686 = vsel %vm1682, %v1667, %v1669
        %v1687 = vsel %vm1682, %v1671, %v1673
        %v1688 = vsel %vm1682, %v1673, %v1675
        %v1689 = vsel %vm1682, %v1677, %v1679
        %v1690 = vsel %vm1682, %v1679, %v1681
        %v1704 = vsel %vm278, %v1656, 0
        %v1707 = vsel %vm278, %v1657, 0
        %1709 = vmatprep.subr.mxu0 %v1684
        %1710 = vmatpush1.msra.mxu0 %v1683
        %1711 = vmatprep.subr.mxu0 %v1686
        %1712 = vmatpush1.msra.mxu0 %v1685
        %1713 = vmatprep.subr.mxu0 %v1688
        %1714 = vmatpush1.msra.mxu0 %v1687
        %1715 = vmatprep.subr.mxu0 %v1690
        %1716 = vmatpush1.msra.mxu0 %v1689
        %1717 = vmatprep.subr.mxu0 0.0
        %1718 = vmatpush1.msra.mxu0 0.0
        %1719 = vmatprep.subr.mxu0 0.0
        %1720 = vmatpush1.msra.mxu0 0.0
        %1721 = vmatprep.subr.mxu0 0.0
        %1722 = vmatpush1.msra.mxu0 0.0
        %1723 = vmatprep.subr.mxu0 0.0
        %1724 = vmatpush1.msra.mxu0 0.0
        %1725 = vmatprep.subr.mxu0 0.0
        %1726 = vmatpush1.msra.mxu0 0.0
        %1727 = vmatprep.subr.mxu0 0.0
        %1728 = vmatpush1.msra.mxu0 0.0
        %1729 = vmatprep.subr.mxu0 0.0
        %1730 = vmatpush1.msra.mxu0 0.0
        %1731 = vmatprep.subr.mxu0 0.0
        %1732 = vmatpush1.msra.mxu0 0.0
        %1733 = vmatprep.subr.mxu0 0.0
        %1734 = vmatpush1.msra.mxu0 0.0
        %1735 = vmatprep.subr.mxu0 0.0
        %1736 = vmatpush1.msra.mxu0 0.0
        %1737 = vmatprep.subr.mxu0 0.0
        %1738 = vmatpush1.msra.mxu0 0.0
        %1739 = vmatprep.subr.mxu0 0.0
        %1740 = vmatpush1.msra.mxu0 0.0
        %1741 = vmatprep.subr.mxu0 0.0
        %1742 = vmatpush1.msra.mxu0 0.0
        %1743 = vmatprep.subr.mxu0 0.0
        %1744 = vmatpush1.msra.mxu0 0.0
        %1745 = vmatprep.subr.mxu0 0.0
        %1746 = vmatpush1.msra.mxu0 0.0
        %1747 = vmatprep.subr.mxu0 0.0
        %1748 = vmatpush1.msra.mxu0 0.0
        %1749 = vmatprep.subr.mxu0 0.0
        %1750 = vmatpush1.msra.mxu0 0.0
        %1751 = vmatprep.subr.mxu0 0.0
        %1752 = vmatpush1.msra.mxu0 0.0
        %1753 = vmatprep.subr.mxu0 0.0
        %1754 = vmatpush1.msra.mxu0 0.0
        %1755 = vmatprep.subr.mxu0 0.0
        %1756 = vmatpush1.msra.mxu0 0.0
        %1757 = vmatprep.subr.mxu0 0.0
        %1758 = vmatpush1.msra.mxu0 0.0
        %1759 = vmatprep.subr.mxu0 0.0
        %1760 = vmatpush1.msra.mxu0 0.0
        %1761 = vmatprep.subr.mxu0 0.0
        %1762 = vmatpush1.msra.mxu0 0.0
        %1763 = vmatprep.subr.mxu0 0.0
        %1764 = vmatpush1.msra.mxu0 0.0
        %1765 = vmatprep.subr.mxu0 0.0
        %1766 = vmatpush1.msra.mxu0 0.0
        %1767 = vmatprep.subr.mxu0 0.0
        %1768 = vmatpush1.msra.mxu0 0.0
        %1769 = vmatprep.subr.mxu0 0.0
        %1770 = vmatpush1.msra.mxu0 0.0
        %1771 = vmatprep.subr.mxu0 0.0
        %1772 = vmatpush1.msra.mxu0 0.0
        %1773 = vmatprep.mubr.f32.mxu0 0.0
        %1774 = vmatmul.mubr.f32.gmra.mrb[0].mxu0 %v1704
        %v1775 = vpop.f32.mrb[0].mxu0
        %v1776 = vadd.f32 0.0, %v1775
        %v1777 = vpop.f32.mrb[0].mxu0
        %v1778 = vadd.f32 0.0, %v1777
        %1779 = vmatprep.mubr.f32.mxu0 0.0
        %1780 = vmatmul.mubr.f32.gmra.mrb[0].mxu0 %v1707
        %v1781 = vpop.f32.mrb[0].mxu0
        %v1782 = vadd.f32 0.0, %v1781
        %v1783 = vpop.f32.mrb[0].mxu0
        %v1784 = vadd.f32 0.0, %v1783
        %1785 = vdwg.mxu0
        %1786 = vmatprep.subr.mxu0 0.0
        %1787 = vmatpush1.msra.mxu0 %v1663
        %1788 = vmatprep.subr.mxu0 0.0
        %1789 = vmatpush1.msra.mxu0 %v1669
        %1790 = vmatprep.subr.mxu0 0.0
        %1791 = vmatpush1.msra.mxu0 %v1675
        %1792 = vmatprep.subr.mxu0 0.0
        %1793 = vmatpush1.msra.mxu0 %v1681
        %1794 = vmatprep.subr.mxu0 0.0
        %1795 = vmatpush1.msra.mxu0 0.0
        %1796 = vmatprep.subr.mxu0 0.0
        %1797 = vmatpush1.msra.mxu0 0.0
        %1798 = vmatprep.subr.mxu0 0.0
        %1799 = vmatpush1.msra.mxu0 0.0
        %1800 = vmatprep.subr.mxu0 0.0
        %1801 = vmatpush1.msra.mxu0 0.0
        %1802 = vmatprep.subr.mxu0 0.0
        %1803 = vmatpush1.msra.mxu0 0.0
        %1804 = vmatprep.subr.mxu0 0.0
        %1805 = vmatpush1.msra.mxu0 0.0
        %1806 = vmatprep.subr.mxu0 0.0
        %1807 = vmatpush1.msra.mxu0 0.0
        %1808 = vmatprep.subr.mxu0 0.0
        %1809 = vmatpush1.msra.mxu0 0.0
        %1810 = vmatprep.subr.mxu0 0.0
        %1811 = vmatpush1.msra.mxu0 0.0
        %1812 = vmatprep.subr.mxu0 0.0
        %1813 = vmatpush1.msra.mxu0 0.0
        %1814 = vmatprep.subr.mxu0 0.0
        %1815 = vmatpush1.msra.mxu0 0.0
        %1816 = vmatprep.subr.mxu0 0.0
        %1817 = vmatpush1.msra.mxu0 0.0
        %1818 = vmatprep.subr.mxu0 0.0
        %1819 = vmatpush1.msra.mxu0 0.0
        %1820 = vmatprep.subr.mxu0 0.0
        %1821 = vmatpush1.msra.mxu0 0.0
        %1822 = vmatprep.subr.mxu0 0.0
        %1823 = vmatpush1.msra.mxu0 0.0
        %1824 = vmatprep.subr.mxu0 0.0
        %1825 = vmatpush1.msra.mxu0 0.0
        %1826 = vmatprep.subr.mxu0 0.0
        %1827 = vmatpush1.msra.mxu0 0.0
        %1828 = vmatprep.subr.mxu0 0.0
        %1829 = vmatpush1.msra.mxu0 0.0
        %1830 = vmatprep.subr.mxu0 0.0
        %1831 = vmatpush1.msra.mxu0 0.0
        %1832 = vmatprep.subr.mxu0 0.0
        %1833 = vmatpush1.msra.mxu0 0.0
        %1834 = vmatprep.subr.mxu0 0.0
        %1835 = vmatpush1.msra.mxu0 0.0
        %1836 = vmatprep.subr.mxu0 0.0
        %1837 = vmatpush1.msra.mxu0 0.0
        %1838 = vmatprep.subr.mxu0 0.0
        %1839 = vmatpush1.msra.mxu0 0.0
        %1840 = vmatprep.subr.mxu0 0.0
        %1841 = vmatpush1.msra.mxu0 0.0
        %1842 = vmatprep.subr.mxu0 0.0
        %1843 = vmatpush1.msra.mxu0 0.0
        %1844 = vmatprep.subr.mxu0 0.0
        %1845 = vmatpush1.msra.mxu0 0.0
        %1846 = vmatprep.subr.mxu0 0.0
        %1847 = vmatpush1.msra.mxu0 0.0
        %1848 = vmatprep.subr.mxu0 0.0
        %1849 = vmatpush1.msra.mxu0 0.0
        %1850 = vmatprep.mubr.f32.mxu0 0.0
        %1851 = vmatmul.mubr.f32.gmra.mrb[0].mxu0 %v1704
        %v1852 = vpop.f32.mrb[0].mxu0
        %v1853 = vadd.f32 0.0, %v1852
        %v1854 = vpop.f32.mrb[0].mxu0
        %1855 = vmatprep.mubr.f32.mxu0 0.0
        %1856 = vmatmul.mubr.f32.gmra.mrb[0].mxu0 %v1707
        %v1857 = vpop.f32.mrb[0].mxu0
        %v1858 = vadd.f32 0.0, %v1857
        %v1859 = vpop.f32.mrb[0].mxu0
        %1860 = vdwg.mxu0
        %v1861 = vadd.f32 %v1649, %v1776
        %v1862 = vadd.f32 %v1650, %v1778
        %v1863 = vadd.f32 %v1651, %v1853
        %v1864 = vadd.f32 %v1652, %v1782
        %v1865 = vadd.f32 %v1653, %v1784
        %v1866 = vadd.f32 %v1654, %v1858
        %s1867 = scalar_lea.vmem [#allocation5], 128
        %v1868 = vld [vmem:[%s1867] sm:$0xff]
        %v1869 = vld [vmem:[%s1867 + $0x8] sm:$0xff]
        %1870 = vrot.lane.b32.xlu0 %v204, 90
        %v1871 = vpop.permute.xlu0 %1870
        %1872 = vrot.lane.b32.xlu0 %v205, 90
        %v1873 = vpop.permute.xlu0 %1872
        %1874 = vrot.lane.b32.xlu0 %v206, 90
        %v1875 = vpop.permute.xlu0 %1874
        %1876 = vrot.lane.b32.xlu0 %v207, 90
        %v1877 = vpop.permute.xlu0 %1876
        %1878 = vrot.lane.b32.xlu0 %v208, 90
        %v1879 = vpop.permute.xlu0 %1878
        %1880 = vrot.lane.b32.xlu0 %v209, 90
        %v1881 = vpop.permute.xlu0 %1880
        %1882 = vrot.lane.b32.xlu0 %v210, 90
        %v1883 = vpop.permute.xlu0 %1882
        %1884 = vrot.lane.b32.xlu0 %v211, 90
        %v1885 = vpop.permute.xlu0 %1884
        %1886 = vrot.lane.b32.xlu0 %v212, 90
        %v1887 = vpop.permute.xlu0 %1886
        %1888 = vrot.lane.b32.xlu0 %v213, 90
        %v1889 = vpop.permute.xlu0 %1888
        %1890 = vrot.lane.b32.xlu0 %v214, 90
        %v1891 = vpop.permute.xlu0 %1890
        %1892 = vrot.lane.b32.xlu0 %v215, 90
        %v1893 = vpop.permute.xlu0 %1892
        %vm1894 = vcmask 736256
        %v1895 = vsel %vm1894, %v1871, %v1873
        %v1896 = vsel %vm1894, %v1873, %v1875
        %v1897 = vsel %vm1894, %v1877, %v1879
        %v1898 = vsel %vm1894, %v1879, %v1881
        %v1899 = vsel %vm1894, %v1883, %v1885
        %v1900 = vsel %vm1894, %v1885, %v1887
        %v1901 = vsel %vm1894, %v1889, %v1891
        %v1902 = vsel %vm1894, %v1891, %v1893
        %v1916 = vsel %vm278, %v1868, 0
        %v1919 = vsel %vm278, %v1869, 0
        %1921 = vmatprep.subr.mxu0 %v1896
        %1922 = vmatpush1.msra.mxu0 %v1895
        %1923 = vmatprep.subr.mxu0 %v1898
        %1924 = vmatpush1.msra.mxu0 %v1897
        %1925 = vmatprep.subr.mxu0 %v1900
        %1926 = vmatpush1.msra.mxu0 %v1899
        %1927 = vmatprep.subr.mxu0 %v1902
        %1928 = vmatpush1.msra.mxu0 %v1901
        %1929 = vmatprep.subr.mxu0 0.0
        %1930 = vmatpush1.msra.mxu0 0.0
        %1931 = vmatprep.subr.mxu0 0.0
        %1932 = vmatpush1.msra.mxu0 0.0
        %1933 = vmatprep.subr.mxu0 0.0
        %1934 = vmatpush1.msra.mxu0 0.0
        %1935 = vmatprep.subr.mxu0 0.0
        %1936 = vmatpush1.msra.mxu0 0.0
        %1937 = vmatprep.subr.mxu0 0.0
        %1938 = vmatpush1.msra.mxu0 0.0
        %1939 = vmatprep.subr.mxu0 0.0
        %1940 = vmatpush1.msra.mxu0 0.0
        %1941 = vmatprep.subr.mxu0 0.0
        %1942 = vmatpush1.msra.mxu0 0.0
        %1943 = vmatprep.subr.mxu0 0.0
        %1944 = vmatpush1.msra.mxu0 0.0
        %1945 = vmatprep.subr.mxu0 0.0
        %1946 = vmatpush1.msra.mxu0 0.0
        %1947 = vmatprep.subr.mxu0 0.0
        %1948 = vmatpush1.msra.mxu0 0.0
        %1949 = vmatprep.subr.mxu0 0.0
        %1950 = vmatpush1.msra.mxu0 0.0
        %1951 = vmatprep.subr.mxu0 0.0
        %1952 = vmatpush1.msra.mxu0 0.0
        %1953 = vmatprep.subr.mxu0 0.0
        %1954 = vmatpush1.msra.mxu0 0.0
        %1955 = vmatprep.subr.mxu0 0.0
        %1956 = vmatpush1.msra.mxu0 0.0
        %1957 = vmatprep.subr.mxu0 0.0
        %1958 = vmatpush1.msra.mxu0 0.0
        %1959 = vmatprep.subr.mxu0 0.0
        %1960 = vmatpush1.msra.mxu0 0.0
        %1961 = vmatprep.subr.mxu0 0.0
        %1962 = vmatpush1.msra.mxu0 0.0
        %1963 = vmatprep.subr.mxu0 0.0
        %1964 = vmatpush1.msra.mxu0 0.0
        %1965 = vmatprep.subr.mxu0 0.0
        %1966 = vmatpush1.msra.mxu0 0.0
        %1967 = vmatprep.subr.mxu0 0.0
        %1968 = vmatpush1.msra.mxu0 0.0
        %1969 = vmatprep.subr.mxu0 0.0
        %1970 = vmatpush1.msra.mxu0 0.0
        %1971 = vmatprep.subr.mxu0 0.0
        %1972 = vmatpush1.msra.mxu0 0.0
        %1973 = vmatprep.subr.mxu0 0.0
        %1974 = vmatpush1.msra.mxu0 0.0
        %1975 = vmatprep.subr.mxu0 0.0
        %1976 = vmatpush1.msra.mxu0 0.0
        %1977 = vmatprep.subr.mxu0 0.0
        %1978 = vmatpush1.msra.mxu0 0.0
        %1979 = vmatprep.subr.mxu0 0.0
        %1980 = vmatpush1.msra.mxu0 0.0
        %1981 = vmatprep.subr.mxu0 0.0
        %1982 = vmatpush1.msra.mxu0 0.0
        %1983 = vmatprep.subr.mxu0 0.0
        %1984 = vmatpush1.msra.mxu0 0.0
        %1985 = vmatprep.mubr.f32.mxu0 0.0
        %1986 = vmatmul.mubr.f32.gmra.mrb[0].mxu0 %v1916
        %v1987 = vpop.f32.mrb[0].mxu0
        %v1988 = vadd.f32 0.0, %v1987
        %v1989 = vpop.f32.mrb[0].mxu0
        %v1990 = vadd.f32 0.0, %v1989
        %1991 = vmatprep.mubr.f32.mxu0 0.0
        %1992 = vmatmul.mubr.f32.gmra.mrb[0].mxu0 %v1919
        %v1993 = vpop.f32.mrb[0].mxu0
        %v1994 = vadd.f32 0.0, %v1993
        %v1995 = vpop.f32.mrb[0].mxu0
        %v1996 = vadd.f32 0.0, %v1995
        %1997 = vdwg.mxu0
        %1998 = vmatprep.subr.mxu0 0.0
        %1999 = vmatpush1.msra.mxu0 %v1875
        %2000 = vmatprep.subr.mxu0 0.0
        %2001 = vmatpush1.msra.mxu0 %v1881
        %2002 = vmatprep.subr.mxu0 0.0
        %2003 = vmatpush1.msra.mxu0 %v1887
        %2004 = vmatprep.subr.mxu0 0.0
        %2005 = vmatpush1.msra.mxu0 %v1893
        %2006 = vmatprep.subr.mxu0 0.0
        %2007 = vmatpush1.msra.mxu0 0.0
        %2008 = vmatprep.subr.mxu0 0.0
        %2009 = vmatpush1.msra.mxu0 0.0
        %2010 = vmatprep.subr.mxu0 0.0
        %2011 = vmatpush1.msra.mxu0 0.0
        %2012 = vmatprep.subr.mxu0 0.0
        %2013 = vmatpush1.msra.mxu0 0.0
        %2014 = vmatprep.subr.mxu0 0.0
        %2015 = vmatpush1.msra.mxu0 0.0
        %2016 = vmatprep.subr.mxu0 0.0
        %2017 = vmatpush1.msra.mxu0 0.0
        %2018 = vmatprep.subr.mxu0 0.0
        %2019 = vmatpush1.msra.mxu0 0.0
        %2020 = vmatprep.subr.mxu0 0.0
        %2021 = vmatpush1.msra.mxu0 0.0
        %2022 = vmatprep.subr.mxu0 0.0
        %2023 = vmatpush1.msra.mxu0 0.0
        %2024 = vmatprep.subr.mxu0 0.0
        %2025 = vmatpush1.msra.mxu0 0.0
        %2026 = vmatprep.subr.mxu0 0.0
        %2027 = vmatpush1.msra.mxu0 0.0
        %2028 = vmatprep.subr.mxu0 0.0
        %2029 = vmatpush1.msra.mxu0 0.0
        %2030 = vmatprep.subr.mxu0 0.0
        %2031 = vmatpush1.msra.mxu0 0.0
        %2032 = vmatprep.subr.mxu0 0.0
        %2033 = vmatpush1.msra.mxu0 0.0
        %2034 = vmatprep.subr.mxu0 0.0
        %2035 = vmatpush1.msra.mxu0 0.0
        %2036 = vmatprep.subr.mxu0 0.0
        %2037 = vmatpush1.msra.mxu0 0.0
        %2038 = vmatprep.subr.mxu0 0.0
        %2039 = vmatpush1.msra.mxu0 0.0
        %2040 = vmatprep.subr.mxu0 0.0
        %2041 = vmatpush1.msra.mxu0 0.0
        %2042 = vmatprep.subr.mxu0 0.0
        %2043 = vmatpush1.msra.mxu0 0.0
        %2044 = vmatprep.subr.mxu0 0.0
        %2045 = vmatpush1.msra.mxu0 0.0
        %2046 = vmatprep.subr.mxu0 0.0
        %2047 = vmatpush1.msra.mxu0 0.0
        %2048 = vmatprep.subr.mxu0 0.0
        %2049 = vmatpush1.msra.mxu0 0.0
        %2050 = vmatprep.subr.mxu0 0.0
        %2051 = vmatpush1.msra.mxu0 0.0
        %2052 = vmatprep.subr.mxu0 0.0
        %2053 = vmatpush1.msra.mxu0 0.0
        %2054 = vmatprep.subr.mxu0 0.0
        %2055 = vmatpush1.msra.mxu0 0.0
        %2056 = vmatprep.subr.mxu0 0.0
        %2057 = vmatpush1.msra.mxu0 0.0
        %2058 = vmatprep.subr.mxu0 0.0
        %2059 = vmatpush1.msra.mxu0 0.0
        %2060 = vmatprep.subr.mxu0 0.0
        %2061 = vmatpush1.msra.mxu0 0.0
        %2062 = vmatprep.mubr.f32.mxu0 0.0
        %2063 = vmatmul.mubr.f32.gmra.mrb[0].mxu0 %v1916
        %v2064 = vpop.f32.mrb[0].mxu0
        %v2065 = vadd.f32 0.0, %v2064
        %v2066 = vpop.f32.mrb[0].mxu0
        %2067 = vmatprep.mubr.f32.mxu0 0.0
        %2068 = vmatmul.mubr.f32.gmra.mrb[0].mxu0 %v1919
        %v2069 = vpop.f32.mrb[0].mxu0
        %v2070 = vadd.f32 0.0, %v2069
        %v2071 = vpop.f32.mrb[0].mxu0
        %2072 = vdwg.mxu0
        %v2073 = vadd.f32 %v1861, %v1988
        %v2074 = vadd.f32 %v1862, %v1990
        %v2075 = vadd.f32 %v1863, %v2065
        %v2076 = vadd.f32 %v1864, %v1994
        %v2077 = vadd.f32 %v1865, %v1996
        %v2078 = vadd.f32 %v1866, %v2070
        %v2079 = vld [vmem:[%s2] sm:$0xff]
        %v2080 = vld [vmem:[%s2 + $0x8] sm:$0xff]
        %2082 = vset.pattern.permute.xlu0 0
        %2083 = vperm.xlu0 %2082, %v2079
        %v2084 = vpop.permute.xlu0 %2083
        %2087 = vset.pattern.permute.xlu0 0
        %2088 = vperm.xlu0 %2087, %v2080
        %v2089 = vpop.permute.xlu0 %2088
        %v2091 = vadd.f32 %v2073, %v2084
        %v2092 = vadd.f32 %v2074, %v2084
        %v2093 = vadd.f32 %v2075, %v2084
        %v2094 = vadd.f32 %v2076, %v2089
        %v2095 = vadd.f32 %v2077, %v2089
        %v2096 = vadd.f32 %v2078, %v2089
        %v2097 = vmax.f32 %v2091, 0.0
        %v2098 = vmax.f32 %v2092, 0.0
        %v2099 = vmax.f32 %v2093, 0.0
        %v2100 = vmax.f32 %v2094, 0.0
        %v2101 = vmax.f32 %v2095, 0.0
        %v2102 = vmax.f32 %v2096, 0.0
        %2103 = vst [vmem:[%s203] sm:$0xff] %v2097
        %2104 = vst [vmem:[%s203 + $0x8] sm:$0xff] %v2098
        %2105 = vst.msk [vmem:[%s203 + $0x10] sm:$0xff] %vm278, %v2099
        %2106 = vst [vmem:[%s203 + $0x18] sm:$0xff] %v2100
        %2107 = vst [vmem:[%s203 + $0x20] sm:$0xff] %v2101
        %2108 = vst.msk [vmem:[%s203 + $0x28] sm:$0xff] %vm278, %v2102
        %s2109 = sand.u32 %s97, 1
        %s2110 = scalar_lea.sflag [#allocation4], %s2109
        %s2111 = sand.u32 %s97, 1
        %s2112 = smul.addr %s2111, 48
        %s2113 = scalar_lea.vmem [#allocation7], %s2112
        // Predicated region
        $region41: #{tpu_custom_call.1} parent=31 // pred_check
          %p2114 = pneg %p107
        $region42: #{tpu_custom_call.1} parent=31 // pred_check_branch
          %2116 = sbr.rel (%p2114) target = $region44
        $region43: #{tpu_custom_call.1} parent=31 // pred_region
          %s2118 = ssub.s32 768, 768
          %2119 = vsyncadd %s2110, %s2118
          %s2120 = smul.addr %s21, 6
          %s2121 = smul.addr %s2120, 128
          %s2122 = scalar_lea.hbm %s3, %s2121
          %s2123 = sshll.u32 %s2113, 4
          %s2124 = int_to_ptr.vmem [resolvable:$true] %s2123
          %2129 = dma.vmem_to_hbm [thread:$0]  %s2124, 768, %s2122, %s2110, 384, 384, 24
        $region44: #{tpu_custom_call.1} parent=31 // pred_fallthru
          _
      $region32: #{tpu_custom_call.1} parent=5 // pred_fallthru
        _
      %p2130 = scmp.le.s32.totalorder 2, %s16
      // Predicated region
      $region45: #{tpu_custom_call.1} parent=5 // pred_check
        %p2131 = pneg %p2130
      $region46: #{tpu_custom_call.1} parent=5 // pred_check_branch
        %2133 = sbr.rel (%p2131) target = $region48
      $region47: #{tpu_custom_call.1} parent=5 // pred_region
        %s2134 = ssub.s32 %s16, 2
        // Predicated region
        $region49: #{tpu_custom_call.1} parent=47 // pred_check
          %p2135 = pneg %p113
        $region50: #{tpu_custom_call.1} parent=47 // pred_check_branch
          %2137 = sbr.rel (%p2135) target = $region52
        $region51: #{tpu_custom_call.1} parent=47 // pred_region
          %s2138 = sand.u32 %s98, 1
          %s2139 = scalar_lea.sflag [#allocation4], %s2138
          %s2140 = sand.u32 %s98, 1
          %s2141 = smul.addr %s2140, 48
          %s2142 = scalar_lea.vmem [#allocation7], %s2141
          %2143 = dma.done %s2139, 768
        $region52: #{tpu_custom_call.1} parent=47 // pred_fallthru
          _
      $region48: #{tpu_custom_call.1} parent=5 // pred_fallthru
        _
    $region6: #{tpu_custom_call.1} parent=1 // loop_footer
      %s20 = sadd.s32 1, %s16
    $region7: #{tpu_custom_call.1} parent=1 // loop_footer_branch
      %15 = sbr.rel target = $region3
    $region8: #{tpu_custom_call.1} parent=1 // loop_exit
      _
    %2144 = vsyncpa [#allocation3], 1
    %s2145 = scalar_lea.sflag [#allocation3], 1
    %2146 = vsyncpa %s2145, 1
    %2147 = vsyncpa [#allocation6], 1
    %2148 = vsyncpa [#allocation4], 1
    %s2149 = scalar_lea.sflag [#allocation4], 1
    %2150 = vsyncpa %s2149, 1

</llo_original>
